<compile_context>
chip_gen: v5e
topology: v5e:2x2
jax: 0.10.0
libtpu: 0.0.40
codegen_flags: <defaults>
</compile_context>

<pallas_src>
import functools

import jax
import jax.numpy as jnp
import numpy as np
from jax.experimental import pallas as pl
from jax.experimental.pallas import tpu as pltpu

NUM_CHANNEL = 3     # DCGAN face discriminator input channels
D_FEATURE = 8       # small D_feature_size for this synthetic test
IMG = 64            # 64 -> 32 -> 16 -> 8 -> 4 -> 1
BN_EPS = 1e-5
NEG_SLOPE = 0.2


# ----------------------------- Pallas kernels --------------------------------
def _conv_lrelu_kernel(w_ref, p_ref, o_ref):
    """(F, K) @ (K, tm) -> LeakyReLU -> bf16 store."""
    acc = jnp.dot(w_ref[...], p_ref[...], preferred_element_type=jnp.float32)
    o_ref[...] = jnp.where(acc >= 0, acc, NEG_SLOPE * acc).astype(o_ref.dtype)


def _conv_bn_lrelu_kernel(w_ref, p_ref, g_ref, b_ref, o_ref, *, inv_m):
    """Fused conv-GEMM + training-mode BatchNorm + LeakyReLU, single program."""
    acc = jnp.dot(w_ref[...], p_ref[...], preferred_element_type=jnp.float32)  # (F, M) f32
    mean = jnp.sum(acc, axis=-1, keepdims=True) * inv_m
    cen = acc - mean
    var = jnp.sum(cen * cen, axis=-1, keepdims=True) * inv_m      # centered -> var >= 0
    scale = g_ref[...] * jax.lax.rsqrt(var + BN_EPS)
    y = cen * scale + b_ref[...]
    o_ref[...] = jnp.where(y >= 0, y, NEG_SLOPE * y).astype(o_ref.dtype)


def _conv_bn_lrelu_head_kernel(w_ref, p_ref, g_ref, b_ref, w5_ref, sel_ref,
                               d_ref, *, inv_m):
    """Layer 4 (conv+BN+LeakyReLU) fused with layer 5 (4x4 valid conv + Sigmoid).

    The L4 activation stays in registers/VMEM and is contracted against the
    lane-tiled final weight; only the (N, 1) logits are stored.
    """
    acc = jnp.dot(w_ref[...], p_ref[...], preferred_element_type=jnp.float32)  # (F, M)
    mean = jnp.sum(acc, axis=-1, keepdims=True) * inv_m
    cen = acc - mean
    var = jnp.sum(cen * cen, axis=-1, keepdims=True) * inv_m
    scale = g_ref[...] * jax.lax.rsqrt(var + BN_EPS)
    y = cen * scale + b_ref[...]
    y = jnp.where(y >= 0, y, NEG_SLOPE * y)                       # (F, M) f32

    prod = y * w5_ref[...]                                        # (F, M)
    col = jnp.sum(prod, axis=0, keepdims=True)                    # (1, M)  channel reduce
    d = jnp.sum(col * sel_ref[...], axis=-1, keepdims=True)       # (N, 1)  per-sample reduce
    d_ref[...] = jax.nn.sigmoid(d)


# ------------------------------- JAX glue ------------------------------------
def _im2col(x, k, s, p, lhs_spec):
    """One-op patch gather -> (K, M) with K=(c,kh,kw) major->minor, M=(n,ho,wo)."""
    pt = jax.lax.conv_general_dilated_patches(
        x, (k, k), (s, s), ((p, p), (p, p)),
        dimension_numbers=(lhs_spec, "OIHW", "CNHW"))
    K, N, Ho, Wo = pt.shape
    return pt.reshape(K, N * Ho * Wo), N, Ho, Wo


def conv_lrelu(x, w, stride, pad, lhs_spec):
    """Layer 1: conv (no bias) + LeakyReLU; returns CNHW bf16 activation."""
    F, C, k, _ = w.shape
    patches, N, Ho, Wo = _im2col(x, k, stride, pad, lhs_spec)
    K, M = patches.shape
    w2d = w.reshape(F, K).astype(jnp.bfloat16)

    # Two M-tiles (when legal) keep a 'parallel' grid axis alive for v7x
    # megacore; on v5e/v6e it is a harmless 2-step loop.
    tm, nt = (M // 2, 2) if (M % 256 == 0) else (M, 1)

    out = pl.pallas_call(
        _conv_lrelu_kernel,
        out_shape=jax.ShapeDtypeStruct((F, M), jnp.bfloat16),
        grid=(nt,),
        in_specs=[
            pl.BlockSpec((F, K), lambda i: (0, 0)),
            pl.BlockSpec((K, tm), lambda i: (0, i)),
        ],
        out_specs=pl.BlockSpec((F, tm), lambda i: (0, i)),
        compiler_params=pltpu.CompilerParams(dimension_semantics=("parallel",)),
    )(w2d, patches)
    return out.reshape(F, N, Ho, Wo)


def conv_bn_lrelu(x_cnhw, w, gamma, beta, stride, pad):
    """Layers 2-3: conv + BatchNorm2d (batch stats) + LeakyReLU, single fused kernel."""
    F, C, k, _ = w.shape
    patches, N, Ho, Wo = _im2col(x_cnhw, k, stride, pad, "CNHW")
    K, M = patches.shape
    w2d = w.reshape(F, K).astype(jnp.bfloat16)

    out = pl.pallas_call(
        functools.partial(_conv_bn_lrelu_kernel, inv_m=1.0 / M),
        out_shape=jax.ShapeDtypeStruct((F, M), jnp.bfloat16),
        grid=(1,),
        in_specs=[
            pl.BlockSpec((F, K), lambda i: (0, 0)),
            pl.BlockSpec((K, M), lambda i: (0, 0)),
            pl.BlockSpec((F, 1), lambda i: (0, 0)),
            pl.BlockSpec((F, 1), lambda i: (0, 0)),
        ],
        out_specs=pl.BlockSpec((F, M), lambda i: (0, 0)),
    )(w2d, patches, gamma, beta)
    return out.reshape(F, N, Ho, Wo)


def conv_bn_lrelu_sigmoid_head(x_cnhw, w4, gamma, beta, w5):
    """Layer 4 + layer 5 fused: conv+BN+LeakyReLU then 4x4 valid conv + Sigmoid."""
    F, C, k, _ = w4.shape
    patches, N, Ho, Wo = _im2col(x_cnhw, k, 2, 1, "CNHW")
    K, M = patches.shape
    hw = Ho * Wo
    assert w5.shape == (1, F, Ho, Wo), w5.shape   # DCGAN: final conv spans the 4x4 map

    w4_2d = w4.reshape(F, K).astype(jnp.bfloat16)
    # Final weight tiled along the (n, ho, wo) lane axis so the contraction is
    # an elementwise multiply + reductions on the VMEM-resident activation.
    w5_tiled = jnp.tile(w5.reshape(F, hw).astype(jnp.float32), (1, N))       # (F, M)
    # Per-sample lane-group selector (host constant).
    sel = (np.arange(M) // hw == np.arange(N)[:, None]).astype(np.float32)   # (N, M)

    d = pl.pallas_call(
        functools.partial(_conv_bn_lrelu_head_kernel, inv_m=1.0 / M),
        out_shape=jax.ShapeDtypeStruct((N, 1), jnp.float32),
        grid=(1,),
        in_specs=[
            pl.BlockSpec((F, K), lambda i: (0, 0)),
            pl.BlockSpec((K, M), lambda i: (0, 0)),
            pl.BlockSpec((F, 1), lambda i: (0, 0)),
            pl.BlockSpec((F, 1), lambda i: (0, 0)),
            pl.BlockSpec((F, M), lambda i: (0, 0)),
            pl.BlockSpec((N, M), lambda i: (0, 0)),
        ],
        out_specs=pl.BlockSpec((N, 1), lambda i: (0, 0)),
    )(w4_2d, patches, gamma, beta, w5_tiled, jnp.asarray(sel))
    return d.reshape(N, 1, 1, 1)


def discriminator_forward(x_nchw, params):
    x = x_nchw.astype(jnp.bfloat16)
    x = conv_lrelu(x, params["w1"], 2, 1, "NCHW")                            # (8,  N, 32, 32)
    x = conv_bn_lrelu(x, params["w2"], params["g2"], params["b2"], 2, 1)     # (16, N, 16, 16)
    x = conv_bn_lrelu(x, params["w3"], params["g3"], params["b3"], 2, 1)     # (32, N,  8,  8)
    return conv_bn_lrelu_sigmoid_head(                                       # (N, 1, 1, 1)
        x, params["w4"], params["g4"], params["b4"], params["w5"])


def init_params(key):
    f = D_FEATURE
    keys = jax.random.split(key, 5)

    def winit(k, shape):
        return 0.02 * jax.random.normal(k, shape, jnp.float32)

    def affine(F):
        g = (1.0 + 0.1 * jnp.linspace(-1.0, 1.0, F, dtype=jnp.float32)).reshape(F, 1)
        b = (0.05 * jnp.linspace(1.0, -1.0, F, dtype=jnp.float32)).reshape(F, 1)
        return g, b

    g2, b2 = affine(2 * f)
    g3, b3 = affine(4 * f)
    g4, b4 = affine(8 * f)
    return {
        "w1": winit(keys[0], (f, NUM_CHANNEL, 4, 4)),
        "w2": winit(keys[1], (2 * f, f, 4, 4)),
        "w3": winit(keys[2], (4 * f, 2 * f, 4, 4)),
        "w4": winit(keys[3], (8 * f, 4 * f, 4, 4)),
        "w5": winit(keys[4], (1, 8 * f, 4, 4)),
        "g2": g2, "b2": b2, "g3": g3, "b3": b3, "g4": g4, "b4": b4,
    }


# ------------------------- pure-JAX reference (check) ------------------------
def reference_forward(x, params):
    def conv(x, w, stride, pad):
        return jax.lax.conv_general_dilated(
            x, w, (stride, stride), ((pad, pad), (pad, pad)),
            dimension_numbers=("NCHW", "OIHW", "NCHW"))

    def bn(x, gamma, beta):
        mean = jnp.mean(x, axis=(0, 2, 3), keepdims=True)
        var = jnp.mean(jnp.square(x - mean), axis=(0, 2, 3), keepdims=True)
        xh = (x - mean) * jax.lax.rsqrt(var + BN_EPS)
        return xh * gamma.reshape(1, -1, 1, 1) + beta.reshape(1, -1, 1, 1)

    def lrelu(v):
        return jnp.where(v >= 0, v, NEG_SLOPE * v)

    x = lrelu(conv(x, params["w1"], 2, 1))
    x = lrelu(bn(conv(x, params["w2"], 2, 1), params["g2"], params["b2"]))
    x = lrelu(bn(conv(x, params["w3"], 2, 1), params["g3"], params["b3"]))
    x = lrelu(bn(conv(x, params["w4"], 2, 1), params["g4"], params["b4"]))
    x = jax.nn.sigmoid(conv(x, params["w5"], 1, 0))
    return x


if __name__ == "__main__":
    key = jax.random.PRNGKey(0)
    kx, kp = jax.random.split(key)
    x = jax.random.normal(kx, (2, NUM_CHANNEL, IMG, IMG), jnp.float32)
    params = init_params(kp)

    out = jax.jit(discriminator_forward)(x, params)
    out = jax.block_until_ready(out)
    assert out.shape == (2, 1, 1, 1), out.shape

    ref = reference_forward(x, params)
    np.testing.assert_allclose(np.asarray(out), np.asarray(ref), rtol=1e-2, atol=1e-2)
    print("KERNEL_OK")
</pallas_src>

<mosaic_0001>
module attributes {stable_mosaic.version = 11 : i64} {
  func.func @_conv_lrelu_kernel(%arg0: i32, %arg1: memref<8x48xbf16, #tpu.memory_space<vmem>>, %arg2: memref<48x1024xbf16, #tpu.memory_space<vmem>>, %arg3: memref<8x1024xbf16, #tpu.memory_space<vmem>>) attributes {dimension_semantics = [#tpu.dimension_semantics<parallel>], iteration_bounds = array<i64: 2>, scalar_prefetch = 0 : i64, scratch_operands = 0 : i64, tpu.core_type = #tpu.core_type<tc>, window_params = [{pipeline_mode = #tpu.pipeline_mode<synchronous>, transform_indices = @transform_0, window_bounds = array<i64: 8, 48>}, {transform_indices = @transform_1, window_bounds = array<i64: 48, 1024>}, {transform_indices = @transform_2, window_bounds = array<i64: 8, 1024>}]} {
    %c0 = arith.constant 0 : index
    %c0_0 = arith.constant 0 : index
    %0 = vector.load %arg1[%c0, %c0_0] : memref<8x48xbf16, #tpu.memory_space<vmem>>, vector<8x48xbf16>
    %c0_1 = arith.constant 0 : index
    %c0_2 = arith.constant 0 : index
    %1 = vector.load %arg2[%c0_1, %c0_2] : memref<48x1024xbf16, #tpu.memory_space<vmem>>, vector<48x1024xbf16>
    %cst = arith.constant dense<0.000000e+00> : vector<8x1024xf32>
    %2 = tpu.matmul %0, %1, %cst {dimension_numbers = #tpu.dot_dimension_numbers<[1], [0], [0], [1], [0, 0, 1, 1], [], []>} : vector<8x48xbf16>, vector<48x1024xbf16>, vector<8x1024xf32> -> vector<8x1024xf32>
    %cst_3 = arith.constant 0.000000e+00 : f32
    %3 = vector.broadcast %cst_3 : f32 to vector<8x1024xf32>
    %4 = arith.cmpf oge, %2, %3 : vector<8x1024xf32>
    %cst_4 = arith.constant 2.000000e-01 : f32
    %5 = vector.broadcast %cst_4 : f32 to vector<8x1024xf32>
    %6 = arith.mulf %5, %2 : vector<8x1024xf32>
    %7 = arith.select %4, %2, %6 : vector<8x1024xi1>, vector<8x1024xf32>
    %8 = arith.truncf %7 : vector<8x1024xf32> to vector<8x1024xbf16>
    %c0_5 = arith.constant 0 : index
    %c0_6 = arith.constant 0 : index
    %9 = vector.load %arg3[%c0_5, %c0_6] : memref<8x1024xbf16, #tpu.memory_space<vmem>>, vector<8x1024xbf16>
    tpu.vector_store %arg3[%c0_5, %c0_6], %8 {strides = array<i32>} : memref<8x1024xbf16, #tpu.memory_space<vmem>>, vector<8x1024xbf16>,
    return
  }
  func.func @transform_0(%arg0: i32) -> (i32, i32) {
    %c0_i32 = arith.constant 0 : i32
    %c0_i32_0 = arith.constant 0 : i32
    %c0_i32_1 = arith.constant 0 : i32
    return %c0_i32, %c0_i32_0 : i32, i32
  }
  func.func @transform_1(%arg0: i32) -> (i32, i32) {
    %c0_i32 = arith.constant 0 : i32
    %c0_i32_0 = arith.constant 0 : i32
    return %c0_i32, %arg0 : i32, i32
  }
  func.func @transform_2(%arg0: i32) -> (i32, i32) {
    %c0_i32 = arith.constant 0 : i32
    %c0_i32_0 = arith.constant 0 : i32
    return %c0_i32, %arg0 : i32, i32
  }
}

module attributes {stable_mosaic.version = 11 : i64} {
  func.func @_conv_bn_lrelu_kernel(%arg0: i32, %arg1: memref<16x128xbf16, #tpu.memory_space<vmem>>, %arg2: memref<128x512xbf16, #tpu.memory_space<vmem>>, %arg3: memref<16x1xf32, #tpu.memory_space<vmem>>, %arg4: memref<16x1xf32, #tpu.memory_space<vmem>>, %arg5: memref<16x512xbf16, #tpu.memory_space<vmem>>) attributes {dimension_semantics = [#tpu.dimension_semantics<arbitrary>], iteration_bounds = array<i64: 1>, scalar_prefetch = 0 : i64, scratch_operands = 0 : i64, tpu.core_type = #tpu.core_type<tc>, window_params = [{pipeline_mode = #tpu.pipeline_mode<synchronous>, transform_indices = @transform_0, window_bounds = array<i64: 16, 128>}, {pipeline_mode = #tpu.pipeline_mode<synchronous>, transform_indices = @transform_1, window_bounds = array<i64: 128, 512>}, {pipeline_mode = #tpu.pipeline_mode<synchronous>, transform_indices = @transform_2, window_bounds = array<i64: 16, 1>}, {pipeline_mode = #tpu.pipeline_mode<synchronous>, transform_indices = @transform_3, window_bounds = array<i64: 16, 1>}, {pipeline_mode = #tpu.pipeline_mode<synchronous>, transform_indices = @transform_4, window_bounds = array<i64: 16, 512>}]} {
    %c0 = arith.constant 0 : index
    %c0_0 = arith.constant 0 : index
    %0 = vector.load %arg1[%c0, %c0_0] : memref<16x128xbf16, #tpu.memory_space<vmem>>, vector<16x128xbf16>
    %c0_1 = arith.constant 0 : index
    %c0_2 = arith.constant 0 : index
    %1 = vector.load %arg2[%c0_1, %c0_2] : memref<128x512xbf16, #tpu.memory_space<vmem>>, vector<128x512xbf16>
    %cst = arith.constant dense<0.000000e+00> : vector<16x512xf32>
    %2 = tpu.matmul %0, %1, %cst {dimension_numbers = #tpu.dot_dimension_numbers<[1], [0], [0], [1], [0, 0, 1, 1], [], []>} : vector<16x128xbf16>, vector<128x512xbf16>, vector<16x512xf32> -> vector<16x512xf32>
    %cst_3 = arith.constant dense<0.000000e+00> : vector<16xf32>
    %3 = vector.multi_reduction <add>, %2, %cst_3 [1] : vector<16x512xf32> to vector<16xf32>
    %4 = vector.shape_cast %3 : vector<16xf32> to vector<16x1xf32>
    %cst_4 = arith.constant 0.001953125 : f32
    %5 = vector.broadcast %cst_4 : f32 to vector<16x1xf32>
    %6 = arith.mulf %4, %5 : vector<16x1xf32>
    %7 = vector.broadcast %6 : vector<16x1xf32> to vector<16x512xf32>
    %8 = arith.subf %2, %7 : vector<16x512xf32>
    %9 = arith.mulf %8, %8 : vector<16x512xf32>
    %cst_5 = arith.constant dense<0.000000e+00> : vector<16xf32>
    %10 = vector.multi_reduction <add>, %9, %cst_5 [1] : vector<16x512xf32> to vector<16xf32>
    %11 = vector.shape_cast %10 : vector<16xf32> to vector<16x1xf32>
    %cst_6 = arith.constant 0.001953125 : f32
    %12 = vector.broadcast %cst_6 : f32 to vector<16x1xf32>
    %13 = arith.mulf %11, %12 : vector<16x1xf32>
    %c0_7 = arith.constant 0 : index
    %c0_8 = arith.constant 0 : index
    %14 = vector.load %arg3[%c0_7, %c0_8] : memref<16x1xf32, #tpu.memory_space<vmem>>, vector<16x1xf32>
    %cst_9 = arith.constant 9.99999974E-6 : f32
    %15 = vector.broadcast %cst_9 : f32 to vector<16x1xf32>
    %16 = arith.addf %13, %15 : vector<16x1xf32>
    %17 = math.rsqrt %16 : vector<16x1xf32>
    %18 = arith.mulf %14, %17 : vector<16x1xf32>
    %19 = vector.broadcast %18 : vector<16x1xf32> to vector<16x512xf32>
    %20 = arith.mulf %8, %19 : vector<16x512xf32>
    %c0_10 = arith.constant 0 : index
    %c0_11 = arith.constant 0 : index
    %21 = vector.load %arg4[%c0_10, %c0_11] : memref<16x1xf32, #tpu.memory_space<vmem>>, vector<16x1xf32>
    %22 = vector.broadcast %21 : vector<16x1xf32> to vector<16x512xf32>
    %23 = arith.addf %20, %22 : vector<16x512xf32>
    %cst_12 = arith.constant 0.000000e+00 : f32
    %24 = vector.broadcast %cst_12 : f32 to vector<16x512xf32>
    %25 = arith.cmpf oge, %23, %24 : vector<16x512xf32>
    %cst_13 = arith.constant 2.000000e-01 : f32
    %26 = vector.broadcast %cst_13 : f32 to vector<16x512xf32>
    %27 = arith.mulf %26, %23 : vector<16x512xf32>
    %28 = arith.select %25, %23, %27 : vector<16x512xi1>, vector<16x512xf32>
    %29 = arith.truncf %28 : vector<16x512xf32> to vector<16x512xbf16>
    %c0_14 = arith.constant 0 : index
    %c0_15 = arith.constant 0 : index
    %30 = vector.load %arg5[%c0_14, %c0_15] : memref<16x512xbf16, #tpu.memory_space<vmem>>, vector<16x512xbf16>
    tpu.vector_store %arg5[%c0_14, %c0_15], %29 {strides = array<i32>} : memref<16x512xbf16, #tpu.memory_space<vmem>>, vector<16x512xbf16>,
    return
  }
  func.func @transform_0(%arg0: i32) -> (i32, i32) {
    %c0_i32 = arith.constant 0 : i32
    %c0_i32_0 = arith.constant 0 : i32
    %c0_i32_1 = arith.constant 0 : i32
    return %c0_i32, %c0_i32_0 : i32, i32
  }
  func.func @transform_1(%arg0: i32) -> (i32, i32) {
    %c0_i32 = arith.constant 0 : i32
    %c0_i32_0 = arith.constant 0 : i32
    %c0_i32_1 = arith.constant 0 : i32
    return %c0_i32, %c0_i32_0 : i32, i32
  }
  func.func @transform_2(%arg0: i32) -> (i32, i32) {
    %c0_i32 = arith.constant 0 : i32
    %c0_i32_0 = arith.constant 0 : i32
    %c0_i32_1 = arith.constant 0 : i32
    return %c0_i32, %c0_i32_0 : i32, i32
  }
  func.func @transform_3(%arg0: i32) -> (i32, i32) {
    %c0_i32 = arith.constant 0 : i32
    %c0_i32_0 = arith.constant 0 : i32
    %c0_i32_1 = arith.constant 0 : i32
    return %c0_i32, %c0_i32_0 : i32, i32
  }
  func.func @transform_4(%arg0: i32) -> (i32, i32) {
    %c0_i32 = arith.constant 0 : i32
    %c0_i32_0 = arith.constant 0 : i32
    %c0_i32_1 = arith.constant 0 : i32
    return %c0_i32, %c0_i32_0 : i32, i32
  }
}

module attributes {stable_mosaic.version = 11 : i64} {
  func.func @_conv_bn_lrelu_kernel(%arg0: i32, %arg1: memref<32x256xbf16, #tpu.memory_space<vmem>>, %arg2: memref<256x128xbf16, #tpu.memory_space<vmem>>, %arg3: memref<32x1xf32, #tpu.memory_space<vmem>>, %arg4: memref<32x1xf32, #tpu.memory_space<vmem>>, %arg5: memref<32x128xbf16, #tpu.memory_space<vmem>>) attributes {dimension_semantics = [#tpu.dimension_semantics<arbitrary>], iteration_bounds = array<i64: 1>, scalar_prefetch = 0 : i64, scratch_operands = 0 : i64, tpu.core_type = #tpu.core_type<tc>, window_params = [{pipeline_mode = #tpu.pipeline_mode<synchronous>, transform_indices = @transform_0, window_bounds = array<i64: 32, 256>}, {pipeline_mode = #tpu.pipeline_mode<synchronous>, transform_indices = @transform_1, window_bounds = array<i64: 256, 128>}, {pipeline_mode = #tpu.pipeline_mode<synchronous>, transform_indices = @transform_2, window_bounds = array<i64: 32, 1>}, {pipeline_mode = #tpu.pipeline_mode<synchronous>, transform_indices = @transform_3, window_bounds = array<i64: 32, 1>}, {pipeline_mode = #tpu.pipeline_mode<synchronous>, transform_indices = @transform_4, window_bounds = array<i64: 32, 128>}]} {
    %c0 = arith.constant 0 : index
    %c0_0 = arith.constant 0 : index
    %0 = vector.load %arg1[%c0, %c0_0] : memref<32x256xbf16, #tpu.memory_space<vmem>>, vector<32x256xbf16>
    %c0_1 = arith.constant 0 : index
    %c0_2 = arith.constant 0 : index
    %1 = vector.load %arg2[%c0_1, %c0_2] : memref<256x128xbf16, #tpu.memory_space<vmem>>, vector<256x128xbf16>
    %cst = arith.constant dense<0.000000e+00> : vector<32x128xf32>
    %2 = tpu.matmul %0, %1, %cst {dimension_numbers = #tpu.dot_dimension_numbers<[1], [0], [0], [1], [0, 0, 1, 1], [], []>} : vector<32x256xbf16>, vector<256x128xbf16>, vector<32x128xf32> -> vector<32x128xf32>
    %cst_3 = arith.constant dense<0.000000e+00> : vector<32xf32>
    %3 = vector.multi_reduction <add>, %2, %cst_3 [1] : vector<32x128xf32> to vector<32xf32>
    %4 = vector.shape_cast %3 : vector<32xf32> to vector<32x1xf32>
    %cst_4 = arith.constant 7.812500e-03 : f32
    %5 = vector.broadcast %cst_4 : f32 to vector<32x1xf32>
    %6 = arith.mulf %4, %5 : vector<32x1xf32>
    %7 = vector.broadcast %6 : vector<32x1xf32> to vector<32x128xf32>
    %8 = arith.subf %2, %7 : vector<32x128xf32>
    %9 = arith.mulf %8, %8 : vector<32x128xf32>
    %cst_5 = arith.constant dense<0.000000e+00> : vector<32xf32>
    %10 = vector.multi_reduction <add>, %9, %cst_5 [1] : vector<32x128xf32> to vector<32xf32>
    %11 = vector.shape_cast %10 : vector<32xf32> to vector<32x1xf32>
    %cst_6 = arith.constant 7.812500e-03 : f32
    %12 = vector.broadcast %cst_6 : f32 to vector<32x1xf32>
    %13 = arith.mulf %11, %12 : vector<32x1xf32>
    %c0_7 = arith.constant 0 : index
    %c0_8 = arith.constant 0 : index
    %14 = vector.load %arg3[%c0_7, %c0_8] : memref<32x1xf32, #tpu.memory_space<vmem>>, vector<32x1xf32>
    %cst_9 = arith.constant 9.99999974E-6 : f32
    %15 = vector.broadcast %cst_9 : f32 to vector<32x1xf32>
    %16 = arith.addf %13, %15 : vector<32x1xf32>
    %17 = math.rsqrt %16 : vector<32x1xf32>
    %18 = arith.mulf %14, %17 : vector<32x1xf32>
    %19 = vector.broadcast %18 : vector<32x1xf32> to vector<32x128xf32>
    %20 = arith.mulf %8, %19 : vector<32x128xf32>
    %c0_10 = arith.constant 0 : index
    %c0_11 = arith.constant 0 : index
    %21 = vector.load %arg4[%c0_10, %c0_11] : memref<32x1xf32, #tpu.memory_space<vmem>>, vector<32x1xf32>
    %22 = vector.broadcast %21 : vector<32x1xf32> to vector<32x128xf32>
    %23 = arith.addf %20, %22 : vector<32x128xf32>
    %cst_12 = arith.constant 0.000000e+00 : f32
    %24 = vector.broadcast %cst_12 : f32 to vector<32x128xf32>
    %25 = arith.cmpf oge, %23, %24 : vector<32x128xf32>
    %cst_13 = arith.constant 2.000000e-01 : f32
    %26 = vector.broadcast %cst_13 : f32 to vector<32x128xf32>
    %27 = arith.mulf %26, %23 : vector<32x128xf32>
    %28 = arith.select %25, %23, %27 : vector<32x128xi1>, vector<32x128xf32>
    %29 = arith.truncf %28 : vector<32x128xf32> to vector<32x128xbf16>
    %c0_14 = arith.constant 0 : index
    %c0_15 = arith.constant 0 : index
    %30 = vector.load %arg5[%c0_14, %c0_15] : memref<32x128xbf16, #tpu.memory_space<vmem>>, vector<32x128xbf16>
    tpu.vector_store %arg5[%c0_14, %c0_15], %29 {strides = array<i32>} : memref<32x128xbf16, #tpu.memory_space<vmem>>, vector<32x128xbf16>,
    return
  }
  func.func @transform_0(%arg0: i32) -> (i32, i32) {
    %c0_i32 = arith.constant 0 : i32
    %c0_i32_0 = arith.constant 0 : i32
    %c0_i32_1 = arith.constant 0 : i32
    return %c0_i32, %c0_i32_0 : i32, i32
  }
  func.func @transform_1(%arg0: i32) -> (i32, i32) {
    %c0_i32 = arith.constant 0 : i32
    %c0_i32_0 = arith.constant 0 : i32
    %c0_i32_1 = arith.constant 0 : i32
    return %c0_i32, %c0_i32_0 : i32, i32
  }
  func.func @transform_2(%arg0: i32) -> (i32, i32) {
    %c0_i32 = arith.constant 0 : i32
    %c0_i32_0 = arith.constant 0 : i32
    %c0_i32_1 = arith.constant 0 : i32
    return %c0_i32, %c0_i32_0 : i32, i32
  }
  func.func @transform_3(%arg0: i32) -> (i32, i32) {
    %c0_i32 = arith.constant 0 : i32
    %c0_i32_0 = arith.constant 0 : i32
    %c0_i32_1 = arith.constant 0 : i32
    return %c0_i32, %c0_i32_0 : i32, i32
  }
  func.func @transform_4(%arg0: i32) -> (i32, i32) {
    %c0_i32 = arith.constant 0 : i32
    %c0_i32_0 = arith.constant 0 : i32
    %c0_i32_1 = arith.constant 0 : i32
    return %c0_i32, %c0_i32_0 : i32, i32
  }
}

module attributes {stable_mosaic.version = 11 : i64} {
  func.func @_conv_bn_lrelu_head_kernel(%arg0: i32, %arg1: memref<64x512xbf16, #tpu.memory_space<vmem>>, %arg2: memref<512x32xbf16, #tpu.memory_space<vmem>>, %arg3: memref<64x1xf32, #tpu.memory_space<vmem>>, %arg4: memref<64x1xf32, #tpu.memory_space<vmem>>, %arg5: memref<64x32xf32, #tpu.memory_space<vmem>>, %arg6: memref<2x32xf32, #tpu.memory_space<vmem>>, %arg7: memref<2x1xf32, #tpu.memory_space<vmem>>) attributes {dimension_semantics = [#tpu.dimension_semantics<arbitrary>], iteration_bounds = array<i64: 1>, scalar_prefetch = 0 : i64, scratch_operands = 0 : i64, tpu.core_type = #tpu.core_type<tc>, window_params = [{pipeline_mode = #tpu.pipeline_mode<synchronous>, transform_indices = @transform_0, window_bounds = array<i64: 64, 512>}, {pipeline_mode = #tpu.pipeline_mode<synchronous>, transform_indices = @transform_1, window_bounds = array<i64: 512, 32>}, {pipeline_mode = #tpu.pipeline_mode<synchronous>, transform_indices = @transform_2, window_bounds = array<i64: 64, 1>}, {pipeline_mode = #tpu.pipeline_mode<synchronous>, transform_indices = @transform_3, window_bounds = array<i64: 64, 1>}, {pipeline_mode = #tpu.pipeline_mode<synchronous>, transform_indices = @transform_4, window_bounds = array<i64: 64, 32>}, {pipeline_mode = #tpu.pipeline_mode<synchronous>, transform_indices = @transform_5, window_bounds = array<i64: 2, 32>}, {pipeline_mode = #tpu.pipeline_mode<synchronous>, transform_indices = @transform_6, window_bounds = array<i64: 2, 1>}]} {
    %c0 = arith.constant 0 : index
    %c0_0 = arith.constant 0 : index
    %0 = vector.load %arg1[%c0, %c0_0] : memref<64x512xbf16, #tpu.memory_space<vmem>>, vector<64x512xbf16>
    %c0_1 = arith.constant 0 : index
    %c0_2 = arith.constant 0 : index
    %1 = vector.load %arg2[%c0_1, %c0_2] : memref<512x32xbf16, #tpu.memory_space<vmem>>, vector<512x32xbf16>
    %cst = arith.constant dense<0.000000e+00> : vector<64x32xf32>
    %2 = tpu.matmul %0, %1, %cst {dimension_numbers = #tpu.dot_dimension_numbers<[1], [0], [0], [1], [0, 0, 1, 1], [], []>} : vector<64x512xbf16>, vector<512x32xbf16>, vector<64x32xf32> -> vector<64x32xf32>
    %cst_3 = arith.constant dense<0.000000e+00> : vector<64xf32>
    %3 = vector.multi_reduction <add>, %2, %cst_3 [1] : vector<64x32xf32> to vector<64xf32>
    %4 = vector.shape_cast %3 : vector<64xf32> to vector<64x1xf32>
    %cst_4 = arith.constant 3.125000e-02 : f32
    %5 = vector.broadcast %cst_4 : f32 to vector<64x1xf32>
    %6 = arith.mulf %4, %5 : vector<64x1xf32>
    %7 = vector.broadcast %6 : vector<64x1xf32> to vector<64x32xf32>
    %8 = arith.subf %2, %7 : vector<64x32xf32>
    %9 = arith.mulf %8, %8 : vector<64x32xf32>
    %cst_5 = arith.constant dense<0.000000e+00> : vector<64xf32>
    %10 = vector.multi_reduction <add>, %9, %cst_5 [1] : vector<64x32xf32> to vector<64xf32>
    %11 = vector.shape_cast %10 : vector<64xf32> to vector<64x1xf32>
    %cst_6 = arith.constant 3.125000e-02 : f32
    %12 = vector.broadcast %cst_6 : f32 to vector<64x1xf32>
    %13 = arith.mulf %11, %12 : vector<64x1xf32>
    %c0_7 = arith.constant 0 : index
    %c0_8 = arith.constant 0 : index
    %14 = vector.load %arg3[%c0_7, %c0_8] : memref<64x1xf32, #tpu.memory_space<vmem>>, vector<64x1xf32>
    %cst_9 = arith.constant 9.99999974E-6 : f32
    %15 = vector.broadcast %cst_9 : f32 to vector<64x1xf32>
    %16 = arith.addf %13, %15 : vector<64x1xf32>
    %17 = math.rsqrt %16 : vector<64x1xf32>
    %18 = arith.mulf %14, %17 : vector<64x1xf32>
    %19 = vector.broadcast %18 : vector<64x1xf32> to vector<64x32xf32>
    %20 = arith.mulf %8, %19 : vector<64x32xf32>
    %c0_10 = arith.constant 0 : index
    %c0_11 = arith.constant 0 : index
    %21 = vector.load %arg4[%c0_10, %c0_11] : memref<64x1xf32, #tpu.memory_space<vmem>>, vector<64x1xf32>
    %22 = vector.broadcast %21 : vector<64x1xf32> to vector<64x32xf32>
    %23 = arith.addf %20, %22 : vector<64x32xf32>
    %cst_12 = arith.constant 0.000000e+00 : f32
    %24 = vector.broadcast %cst_12 : f32 to vector<64x32xf32>
    %25 = arith.cmpf oge, %23, %24 : vector<64x32xf32>
    %cst_13 = arith.constant 2.000000e-01 : f32
    %26 = vector.broadcast %cst_13 : f32 to vector<64x32xf32>
    %27 = arith.mulf %26, %23 : vector<64x32xf32>
    %28 = arith.select %25, %23, %27 : vector<64x32xi1>, vector<64x32xf32>
    %c0_14 = arith.constant 0 : index
    %c0_15 = arith.constant 0 : index
    %29 = vector.load %arg5[%c0_14, %c0_15] : memref<64x32xf32, #tpu.memory_space<vmem>>, vector<64x32xf32>
    %30 = arith.mulf %28, %29 : vector<64x32xf32>
    %cst_16 = arith.constant dense<0.000000e+00> : vector<32xf32>
    %31 = vector.multi_reduction <add>, %30, %cst_16 [0] : vector<64x32xf32> to vector<32xf32>
    %32 = vector.shape_cast %31 : vector<32xf32> to vector<1x32xf32>
    %c0_17 = arith.constant 0 : index
    %c0_18 = arith.constant 0 : index
    %33 = vector.load %arg6[%c0_17, %c0_18] : memref<2x32xf32, #tpu.memory_space<vmem>>, vector<2x32xf32>
    %34 = vector.broadcast %32 : vector<1x32xf32> to vector<2x32xf32>
    %35 = arith.mulf %34, %33 : vector<2x32xf32>
    %cst_19 = arith.constant dense<0.000000e+00> : vector<2xf32>
    %36 = vector.multi_reduction <add>, %35, %cst_19 [1] : vector<2x32xf32> to vector<2xf32>
    %37 = vector.shape_cast %36 : vector<2xf32> to vector<2x1xf32>
    %38 = arith.negf %37 : vector<2x1xf32>
    %39 = math.exp %38 : vector<2x1xf32>
    %cst_20 = arith.constant 1.000000e+00 : f32
    %40 = vector.broadcast %cst_20 : f32 to vector<2x1xf32>
    %41 = arith.addf %40, %39 : vector<2x1xf32>
    %42 = arith.divf %40, %41 : vector<2x1xf32>
    %c0_21 = arith.constant 0 : index
    %c0_22 = arith.constant 0 : index
    %43 = vector.load %arg7[%c0_21, %c0_22] : memref<2x1xf32, #tpu.memory_space<vmem>>, vector<2x1xf32>
    tpu.vector_store %arg7[%c0_21, %c0_22], %42 {strides = array<i32>} : memref<2x1xf32, #tpu.memory_space<vmem>>, vector<2x1xf32>,
    return
  }
  func.func @transform_0(%arg0: i32) -> (i32, i32) {
    %c0_i32 = arith.constant 0 : i32
    %c0_i32_0 = arith.constant 0 : i32
    %c0_i32_1 = arith.constant 0 : i32
    return %c0_i32, %c0_i32_0 : i32, i32
  }
  func.func @transform_1(%arg0: i32) -> (i32, i32) {
    %c0_i32 = arith.constant 0 : i32
    %c0_i32_0 = arith.constant 0 : i32
    %c0_i32_1 = arith.constant 0 : i32
    return %c0_i32, %c0_i32_0 : i32, i32
  }
  func.func @transform_2(%arg0: i32) -> (i32, i32) {
    %c0_i32 = arith.constant 0 : i32
    %c0_i32_0 = arith.constant 0 : i32
    %c0_i32_1 = arith.constant 0 : i32
    return %c0_i32, %c0_i32_0 : i32, i32
  }
  func.func @transform_3(%arg0: i32) -> (i32, i32) {
    %c0_i32 = arith.constant 0 : i32
    %c0_i32_0 = arith.constant 0 : i32
    %c0_i32_1 = arith.constant 0 : i32
    return %c0_i32, %c0_i32_0 : i32, i32
  }
  func.func @transform_4(%arg0: i32) -> (i32, i32) {
    %c0_i32 = arith.constant 0 : i32
    %c0_i32_0 = arith.constant 0 : i32
    %c0_i32_1 = arith.constant 0 : i32
    return %c0_i32, %c0_i32_0 : i32, i32
  }
  func.func @transform_5(%arg0: i32) -> (i32, i32) {
    %c0_i32 = arith.constant 0 : i32
    %c0_i32_0 = arith.constant 0 : i32
    %c0_i32_1 = arith.constant 0 : i32
    return %c0_i32, %c0_i32_0 : i32, i32
  }
  func.func @transform_6(%arg0: i32) -> (i32, i32) {
    %c0_i32 = arith.constant 0 : i32
    %c0_i32_0 = arith.constant 0 : i32
    %c0_i32_1 = arith.constant 0 : i32
    return %c0_i32, %c0_i32_0 : i32, i32
  }
}

</mosaic_0001>

<llo_original>
// kernel: discriminator_forward.4
$region0: #{discriminator_forward.4}
  #allocation0 [shape = 'u32[]', space=smem, size = 0x4, offset = 0x4, fixed_abs, tag = 'smem constant byte address 0x4 - core index']
  #allocation1 [shape = 'u32[72,128]{1,0:T(1,128)}', space=vmem, size = 0x9000, scoped, tag = 'internal scratch']
  %s0 = inlined_call_operand.vmem [shape: bf16[8,48], index: 0, kind: input, shape index: {}]
  %s1 = inlined_call_operand.vmem [shape: bf16[48,2048], index: 1, kind: input, shape index: {}]
  %s2 = inlined_call_operand.vmem [shape: bf16[8,2048], index: 2, kind: output, shape index: {}]
  %s3 = sld [smem:[#allocation0]]
  $region64: #{discriminator_forward.4} parent=0
    _
  %s5 = ssub.s32 1, %s3
  %s6 = scalar_select 0, %s5, %s3
  $region1: #{discriminator_forward.4} parent=0
    #allocation2 [shape = 'u8[196608]{0}', space=vmem, size = 0x30000, scoped, tag = 'input window, operand 1']
    loop: start=0, step=1, limit=4
    $region2: #{discriminator_forward.4} parent=1 // loop_pre_header
      _
    $region3: #{discriminator_forward.4} parent=1 // loop_header
      %s8 = sphi 0, %s12
      %p9 = scmp.ge.s32.totalorder %s8, 4
      %s16 = sphi 0, %s16
      %s18 = sphi 0, %s16
      %s19 = sphi 0, %s18
      %s33 = sphi 0, %s19
      %s39 = sphi 0, %s41
      %s42 = sphi 0, %s39
      %s43 = sphi 0, %s42
      %s59 = sphi 0, %s43
      %s65 = sphi 0, %s67
      %s68 = sphi 0, %s65
      %s69 = sphi 0, %s68
      %s85 = sphi 0, %s69
    $region4: #{discriminator_forward.4} parent=1 // loop_header_branch
      %11 = sbr.rel (%p9) target = $region8
    $region5: #{discriminator_forward.4} parent=1 // loop_body
      %s13 = ssub.s32 %s8, 1
      %s14 = ssub.s32 %s8, 2
      %s15 = sadd.s32 %s8, 1
      %s17 = sadd.s32 %s16, 1
      %p20 = scmp.eq.s32.totalorder %s8, 1
      %p21 = scmp.ne.s32.totalorder %s16, %s18
      %p22 = scmp.eq.s32.totalorder %s8, 0
      %p23 = por %p21, %p22
      %p24 = scmp.ne.s32.totalorder %s16, %s18
      %p25 = scmp.eq.s32.totalorder %s13, 1
      %p26 = por %p24, %p25
      %p27 = scmp.ne.s32.totalorder %s18, %s19
      %p28 = scmp.eq.s32.totalorder %s13, 0
      %p29 = por %p27, %p28
      %p30 = scmp.ne.s32.totalorder %s18, %s19
      %p31 = scmp.eq.s32.totalorder %s14, 1
      %p32 = por %p30, %p31
      %p34 = scmp.ne.s32.totalorder %s19, %s33
      %p35 = scmp.eq.s32.totalorder %s14, 0
      %p36 = por %p34, %p35
      %s37 = ssub.s32 %s8, %s15
      %p38 = scmp.eq.s32.totalorder %s37, 0
      %s40 = sadd.s32 %s39, 1
      %s41 = scalar_select %p38, %s39, %s40
      %p44 = pneg %p38
      %p45 = scmp.eq.s32.totalorder %s8, 1
      %p46 = por %p44, %p45
      %p47 = scmp.ne.s32.totalorder %s39, %s42
      %p48 = scmp.eq.s32.totalorder %s8, 0
      %p49 = por %p47, %p48
      %p50 = scmp.ne.s32.totalorder %s39, %s42
      %p51 = scmp.eq.s32.totalorder %s13, 1
      %p52 = por %p50, %p51
      %p53 = scmp.ne.s32.totalorder %s42, %s43
      %p54 = scmp.eq.s32.totalorder %s13, 0
      %p55 = por %p53, %p54
      %p56 = scmp.ne.s32.totalorder %s42, %s43
      %p57 = scmp.eq.s32.totalorder %s14, 1
      %p58 = por %p56, %p57
      %p60 = scmp.ne.s32.totalorder %s43, %s59
      %p61 = scmp.eq.s32.totalorder %s14, 0
      %p62 = por %p60, %p61
      %s63 = ssub.s32 %s8, %s15
      %p64 = scmp.eq.s32.totalorder %s63, 0
      %s66 = sadd.s32 %s65, 1
      %s67 = scalar_select %p64, %s65, %s66
      %p70 = pneg %p64
      %p71 = scmp.eq.s32.totalorder %s8, 1
      %p72 = por %p70, %p71
      %p73 = scmp.ne.s32.totalorder %s65, %s68
      %p74 = scmp.eq.s32.totalorder %s8, 0
      %p75 = por %p73, %p74
      %p76 = scmp.ne.s32.totalorder %s65, %s68
      %p77 = scmp.eq.s32.totalorder %s13, 1
      %p78 = por %p76, %p77
      %p79 = scmp.ne.s32.totalorder %s68, %s69
      %p80 = scmp.eq.s32.totalorder %s13, 0
      %p81 = por %p79, %p80
      %p82 = scmp.ne.s32.totalorder %s68, %s69
      %p83 = scmp.eq.s32.totalorder %s14, 1
      %p84 = por %p82, %p83
      %p86 = scmp.ne.s32.totalorder %s69, %s85
      %p87 = scmp.eq.s32.totalorder %s14, 0
      %p88 = por %p86, %p87
      %p89 = scmp.le.s32.totalorder 1, %s8
      %p90 = scmp.lt.s32.totalorder %s8, 3
      %p91 = pnand %p89, %p90
      %p92 = pneg %p91
      // Predicated region
      $region9: #{discriminator_forward.4} parent=5 // pred_check
        _
      $region10: #{discriminator_forward.4} parent=5 // pred_check_branch
        %94 = sbr.rel (%p91) target = $region12
      $region11: #{discriminator_forward.4} parent=5 // pred_region
        %s95 = ssub.s32 %s8, 1
        // Predicated region
        $region13: #{discriminator_forward.4} parent=11 // pred_check
          %p96 = pneg %p29
        $region14: #{discriminator_forward.4} parent=11 // pred_check_branch
          %98 = sbr.rel (%p96) target = $region16
        $region15: #{discriminator_forward.4} parent=11 // pred_region
          _
        $region16: #{discriminator_forward.4} parent=11 // pred_fallthru
          _
      $region12: #{discriminator_forward.4} parent=5 // pred_fallthru
        _
      %p99 = scmp.lt.s32.totalorder %s8, 2
      // Predicated region
      $region17: #{discriminator_forward.4} parent=5 // pred_check
        %p100 = pneg %p99
      $region18: #{discriminator_forward.4} parent=5 // pred_check_branch
        %102 = sbr.rel (%p100) target = $region20
      $region19: #{discriminator_forward.4} parent=5 // pred_region
        // Predicated region
        $region21: #{discriminator_forward.4} parent=19 // pred_check
          %p103 = pneg %p49
        $region22: #{discriminator_forward.4} parent=19 // pred_check_branch
          %105 = sbr.rel (%p103) target = $region24
        $region23: #{discriminator_forward.4} parent=19 // pred_region
          %s106 = sand.u32 %s39, 1
          %s107 = sand.u32 %s39, 1
          %s108 = smul.addr %s107, 192
          %s109 = scalar_lea.vmem [#allocation2], %s108
          %s110 = smul.u32 8, %s8
          %s111 = smul.addr %s110, 4
          %s112 = scalar_lea.vmem %s1, %s111
          // Predicated region
          $region25: #{discriminator_forward.4} parent=23 // pred_check
            _
          $region26: #{discriminator_forward.4} parent=23 // pred_check_branch
            %114 = sbr.rel (0) target = $region28
          $region27: #{discriminator_forward.4} parent=23 // pred_region
            // Predicated region
            $region29: #{discriminator_forward.4} parent=27 // pred_check
              _
            $region30: #{discriminator_forward.4} parent=27 // pred_check_branch
              %116 = sbr.rel (0) target = $region32
            $region31: #{discriminator_forward.4} parent=27 // pred_region
              loop: start=0, step=1, limit=1
              $region33: #{discriminator_forward.4} parent=31 // loop_pre_header
                _
              $region34: #{discriminator_forward.4} parent=31 // loop_header
                %s118 = sphi 0, %s122
                %p119 = scmp.ge.s32.totalorder %s118, 1
                %s123 = sphi %s112, %s112
                %s124 = sphi %s109, %s109
              $region35: #{discriminator_forward.4} parent=31 // loop_header_branch
                %121 = sbr.rel (%p119) target = $region39
              $region36: #{discriminator_forward.4} parent=31 // loop_body
                %v125 = vld [vmem:[%s123] sm:$0xff]
                %126 = vst [vmem:[%s124] sm:$0xff] %v125
                %v127 = vld [vmem:[%s123 + $0x8] sm:$0xff]
                %128 = vst [vmem:[%s124 + $0x8] sm:$0xff] %v127
                %v129 = vld [vmem:[%s123 + $0x10] sm:$0xff]
                %130 = vst [vmem:[%s124 + $0x10] sm:$0xff] %v129
                %v131 = vld [vmem:[%s123 + $0x18] sm:$0xff]
                %132 = vst [vmem:[%s124 + $0x18] sm:$0xff] %v131
                %v133 = vld [vmem:[%s123 + $0x40] sm:$0xff]
                %134 = vst [vmem:[%s124 + $0x20] sm:$0xff] %v133
                %v135 = vld [vmem:[%s123 + $0x48] sm:$0xff]
                %136 = vst [vmem:[%s124 + $0x28] sm:$0xff] %v135
                %v137 = vld [vmem:[%s123 + $0x50] sm:$0xff]
                %138 = vst [vmem:[%s124 + $0x30] sm:$0xff] %v137
                %v139 = vld [vmem:[%s123 + $0x58] sm:$0xff]
                %140 = vst [vmem:[%s124 + $0x38] sm:$0xff] %v139
                %v141 = vld [vmem:[%s123 + $0x80] sm:$0xff]
                %142 = vst [vmem:[%s124 + $0x40] sm:$0xff] %v141
                %v143 = vld [vmem:[%s123 + $0x88] sm:$0xff]
                %144 = vst [vmem:[%s124 + $0x48] sm:$0xff] %v143
                %v145 = vld [vmem:[%s123 + $0x90] sm:$0xff]
                %146 = vst [vmem:[%s124 + $0x50] sm:$0xff] %v145
                %v147 = vld [vmem:[%s123 + $0x98] sm:$0xff]
                %148 = vst [vmem:[%s124 + $0x58] sm:$0xff] %v147
                %v149 = vld [vmem:[%s123 + $0xc0] sm:$0xff]
                %150 = vst [vmem:[%s124 + $0x60] sm:$0xff] %v149
                %v151 = vld [vmem:[%s123 + $0xc8] sm:$0xff]
                %152 = vst [vmem:[%s124 + $0x68] sm:$0xff] %v151
                %v153 = vld [vmem:[%s123 + $0xd0] sm:$0xff]
                %154 = vst [vmem:[%s124 + $0x70] sm:$0xff] %v153
                %v155 = vld [vmem:[%s123 + $0xd8] sm:$0xff]
                %156 = vst [vmem:[%s124 + $0x78] sm:$0xff] %v155
                %v157 = vld [vmem:[%s123 + $0x100] sm:$0xff]
                %158 = vst [vmem:[%s124 + $0x80] sm:$0xff] %v157
                %v159 = vld [vmem:[%s123 + $0x108] sm:$0xff]
                %160 = vst [vmem:[%s124 + $0x88] sm:$0xff] %v159
                %v161 = vld [vmem:[%s123 + $0x110] sm:$0xff]
                %162 = vst [vmem:[%s124 + $0x90] sm:$0xff] %v161
                %v163 = vld [vmem:[%s123 + $0x118] sm:$0xff]
                %164 = vst [vmem:[%s124 + $0x98] sm:$0xff] %v163
                %v165 = vld [vmem:[%s123 + $0x140] sm:$0xff]
                %166 = vst [vmem:[%s124 + $0xa0] sm:$0xff] %v165
                %v167 = vld [vmem:[%s123 + $0x148] sm:$0xff]
                %168 = vst [vmem:[%s124 + $0xa8] sm:$0xff] %v167
                %v169 = vld [vmem:[%s123 + $0x150] sm:$0xff]
                %170 = vst [vmem:[%s124 + $0xb0] sm:$0xff] %v169
                %v171 = vld [vmem:[%s123 + $0x158] sm:$0xff]
                %172 = vst [vmem:[%s124 + $0xb8] sm:$0xff] %v171
              $region37: #{discriminator_forward.4} parent=31 // loop_footer
                %s122 = sadd.s32 1, %s118
              $region38: #{discriminator_forward.4} parent=31 // loop_footer_branch
                %117 = sbr.rel target = $region34
              $region39: #{discriminator_forward.4} parent=31 // loop_exit
                _
            $region32: #{discriminator_forward.4} parent=27 // pred_fallthru
              _
            // Predicated region
            $region40: #{discriminator_forward.4} parent=27 // pred_check
              _
            $region41: #{discriminator_forward.4} parent=27 // pred_check_branch
              %174 = sbr.rel target = $region43
            $region42: #{discriminator_forward.4} parent=27 // pred_region
              _
            $region43: #{discriminator_forward.4} parent=27 // pred_fallthru
              _
          $region28: #{discriminator_forward.4} parent=23 // pred_fallthru
            _
          %175 = vnop
        $region24: #{discriminator_forward.4} parent=19 // pred_fallthru
          _
      $region20: #{discriminator_forward.4} parent=5 // pred_fallthru
        _
      %p176 = scmp.le.s32.totalorder 1, %s8
      %p177 = scmp.lt.s32.totalorder %s8, 3
      %p178 = pnand %p176, %p177
      %p179 = pneg %p178
      // Predicated region
      $region44: #{discriminator_forward.4} parent=5 // pred_check
        _
      $region45: #{discriminator_forward.4} parent=5 // pred_check_branch
        %181 = sbr.rel (%p178) target = $region47
      $region46: #{discriminator_forward.4} parent=5 // pred_region
        %s182 = ssub.s32 %s8, 1
        %s183 = sand.u32 %s42, 1
        %s184 = sand.u32 %s42, 1
        %s185 = smul.addr %s184, 192
        %s186 = scalar_lea.vmem [#allocation2], %s185
        // Predicated region
        $region48: #{discriminator_forward.4} parent=46 // pred_check
          %p187 = pneg %p55
        $region49: #{discriminator_forward.4} parent=46 // pred_check_branch
          %189 = sbr.rel (%p187) target = $region51
        $region50: #{discriminator_forward.4} parent=46 // pred_region
          _
        $region51: #{discriminator_forward.4} parent=46 // pred_fallthru
          _
        %p190 = pneg %p29
        %p191 = pneg %p26
        %s192 = sand.u32 %s42, 1
        %s193 = sand.u32 %s42, 1
        %s194 = smul.addr %s193, 192
        %s195 = scalar_lea.vmem [#allocation2], %s194
        %p196 = pneg %p55
        %p197 = pneg %p52
        %p198 = pneg %p81
        %p199 = pneg %p78
        %s200 = smul.u32 8, %s13
        %p201 = scmp.lt.s32.totalorder %s200, 15
        %s202 = scalar_select %p201, %s200, 15
        %s203 = smul.addr %s202, 4
        %s204 = scalar_lea.vmem %s2, %s203
        %s205 = smul.u32 8, %s13
        %s206 = smul.u32 8, %s13
        %p207 = scmp.lt.s32.totalorder %s206, 15
        %s208 = scalar_select %p207, %s206, 15
        %s209 = smul.addr %s208, 4
        %s210 = scalar_lea.vmem %s2, %s209
        %s211 = smul.u32 8, %s13
        %v213 = vld [vmem:[%s0] sm:$0xf]
        %v214 = vld [vmem:[%s186] sm:$0xff]
        %v215 = vld [vmem:[%s186 + $0x8] sm:$0xff]
        %v216 = vld [vmem:[%s186 + $0x10] sm:$0xff]
        %v217 = vld [vmem:[%s186 + $0x18] sm:$0xff]
        %v218 = vld [vmem:[%s186 + $0x20] sm:$0xff]
        %v219 = vld [vmem:[%s186 + $0x28] sm:$0xff]
        %v220 = vld [vmem:[%s186 + $0x30] sm:$0xff]
        %v221 = vld [vmem:[%s186 + $0x38] sm:$0xff]
        %v222 = vld [vmem:[%s186 + $0x40] sm:$0xff]
        %v223 = vld [vmem:[%s186 + $0x48] sm:$0xff]
        %v224 = vld [vmem:[%s186 + $0x50] sm:$0xff]
        %v225 = vld [vmem:[%s186 + $0x58] sm:$0xff]
        %v226 = vld [vmem:[%s186 + $0x60] sm:$0xff]
        %v227 = vld [vmem:[%s186 + $0x68] sm:$0xff]
        %v228 = vld [vmem:[%s186 + $0x70] sm:$0xff]
        %v229 = vld [vmem:[%s186 + $0x78] sm:$0xff]
        %v230 = vld [vmem:[%s186 + $0x80] sm:$0xff]
        %v231 = vld [vmem:[%s186 + $0x88] sm:$0xff]
        %v232 = vld [vmem:[%s186 + $0x90] sm:$0xff]
        %v233 = vld [vmem:[%s186 + $0x98] sm:$0xff]
        %v234 = vld [vmem:[%s186 + $0xa0] sm:$0xff]
        %v235 = vld [vmem:[%s186 + $0xa8] sm:$0xff]
        %v236 = vld [vmem:[%s186 + $0xb0] sm:$0xff]
        %v237 = vld [vmem:[%s186 + $0xb8] sm:$0xff]
        %v262 = vunpack.c.l.b16 %v214
        %v263 = vunpack.c.h.b16 %v214
        %v264 = vunpack.c.l.b16 %v215
        %v265 = vunpack.c.h.b16 %v215
        %v266 = vunpack.c.l.b16 %v216
        %v267 = vunpack.c.h.b16 %v216
        %v268 = vunpack.c.l.b16 %v217
        %v269 = vunpack.c.h.b16 %v217
        %v270 = vunpack.c.l.b16 %v218
        %v271 = vunpack.c.h.b16 %v218
        %v272 = vunpack.c.l.b16 %v219
        %v273 = vunpack.c.h.b16 %v219
        %v274 = vunpack.c.l.b16 %v220
        %v275 = vunpack.c.h.b16 %v220
        %v276 = vunpack.c.l.b16 %v221
        %v277 = vunpack.c.h.b16 %v221
        %v278 = vunpack.c.l.b16 %v222
        %v279 = vunpack.c.h.b16 %v222
        %v280 = vunpack.c.l.b16 %v223
        %v281 = vunpack.c.h.b16 %v223
        %v282 = vunpack.c.l.b16 %v224
        %v283 = vunpack.c.h.b16 %v224
        %v284 = vunpack.c.l.b16 %v225
        %v285 = vunpack.c.h.b16 %v225
        %v286 = vunpack.c.l.b16 %v226
        %v287 = vunpack.c.h.b16 %v226
        %v288 = vunpack.c.l.b16 %v227
        %v289 = vunpack.c.h.b16 %v227
        %v290 = vunpack.c.l.b16 %v228
        %v291 = vunpack.c.h.b16 %v228
        %v292 = vunpack.c.l.b16 %v229
        %v293 = vunpack.c.h.b16 %v229
        %v294 = vunpack.c.l.b16 %v230
        %v295 = vunpack.c.h.b16 %v230
        %v296 = vunpack.c.l.b16 %v231
        %v297 = vunpack.c.h.b16 %v231
        %v298 = vunpack.c.l.b16 %v232
        %v299 = vunpack.c.h.b16 %v232
        %v300 = vunpack.c.l.b16 %v233
        %v301 = vunpack.c.h.b16 %v233
        %v302 = vunpack.c.l.b16 %v234
        %v303 = vunpack.c.h.b16 %v234
        %v304 = vunpack.c.l.b16 %v235
        %v305 = vunpack.c.h.b16 %v235
        %v306 = vunpack.c.l.b16 %v236
        %v307 = vunpack.c.h.b16 %v236
        %v308 = vunpack.c.l.b16 %v237
        %v309 = vunpack.c.h.b16 %v237
        %v310 = vpack.c.b16 %v270, %v262
        %v311 = vpack.c.b16 %v271, %v263
        %v312 = vpack.c.b16 %v272, %v264
        %v313 = vpack.c.b16 %v273, %v265
        %v314 = vpack.c.b16 %v274, %v266
        %v315 = vpack.c.b16 %v275, %v267
        %v316 = vpack.c.b16 %v276, %v268
        %v317 = vpack.c.b16 %v277, %v269
        %v318 = vpack.c.b16 %v286, %v278
        %v319 = vpack.c.b16 %v287, %v279
        %v320 = vpack.c.b16 %v288, %v280
        %v321 = vpack.c.b16 %v289, %v281
        %v322 = vpack.c.b16 %v290, %v282
        %v323 = vpack.c.b16 %v291, %v283
        %v324 = vpack.c.b16 %v292, %v284
        %v325 = vpack.c.b16 %v293, %v285
        %v326 = vpack.c.b16 %v302, %v294
        %v327 = vpack.c.b16 %v303, %v295
        %v328 = vpack.c.b16 %v304, %v296
        %v329 = vpack.c.b16 %v305, %v297
        %v330 = vpack.c.b16 %v306, %v298
        %v331 = vpack.c.b16 %v307, %v299
        %v332 = vpack.c.b16 %v308, %v300
        %v333 = vpack.c.b16 %v309, %v301
        %vm358 = vcmask 392192
        %v360 = vsel %vm358, %v213, 0
        %362 = vmatpush.bf16.msra.mxu0 0
        %363 = vmatpush.bf16.msra.mxu0 0
        %364 = vmatpush.bf16.msra.mxu0 0
        %365 = vmatpush.bf16.msra.mxu0 0
        %366 = vmatpush.bf16.msra.mxu0 0
        %367 = vmatpush.bf16.msra.mxu0 %v326
        %368 = vmatpush.bf16.msra.mxu0 %v318
        %369 = vmatpush.bf16.msra.mxu0 %v310
        %370 = vmatmul.bf16.gmra.mxu0 %v360
        %v371 = vpop.f32.mrf.mxu0
        %v372 = vadd.f32 0.0, %v371
        %v373 = vpop.f32.mrf.mxu0
        %374 = vdwg.mxu0
        %375 = vmatpush.bf16.msra.mxu0 0
        %376 = vmatpush.bf16.msra.mxu0 0
        %377 = vmatpush.bf16.msra.mxu0 0
        %378 = vmatpush.bf16.msra.mxu0 0
        %379 = vmatpush.bf16.msra.mxu0 0
        %380 = vmatpush.bf16.msra.mxu0 %v327
        %381 = vmatpush.bf16.msra.mxu0 %v319
        %382 = vmatpush.bf16.msra.mxu0 %v311
        %383 = vmatmul.bf16.gmra.mxu0 %v360
        %v384 = vpop.f32.mrf.mxu0
        %v385 = vadd.f32 0.0, %v384
        %v386 = vpop.f32.mrf.mxu0
        %387 = vdwg.mxu0
        %388 = vmatpush.bf16.msra.mxu0 0
        %389 = vmatpush.bf16.msra.mxu0 0
        %390 = vmatpush.bf16.msra.mxu0 0
        %391 = vmatpush.bf16.msra.mxu0 0
        %392 = vmatpush.bf16.msra.mxu0 0
        %393 = vmatpush.bf16.msra.mxu0 %v328
        %394 = vmatpush.bf16.msra.mxu0 %v320
        %395 = vmatpush.bf16.msra.mxu0 %v312
        %396 = vmatmul.bf16.gmra.mxu0 %v360
        %v397 = vpop.f32.mrf.mxu0
        %v398 = vadd.f32 0.0, %v397
        %v399 = vpop.f32.mrf.mxu0
        %400 = vdwg.mxu0
        %401 = vmatpush.bf16.msra.mxu0 0
        %402 = vmatpush.bf16.msra.mxu0 0
        %403 = vmatpush.bf16.msra.mxu0 0
        %404 = vmatpush.bf16.msra.mxu0 0
        %405 = vmatpush.bf16.msra.mxu0 0
        %406 = vmatpush.bf16.msra.mxu0 %v329
        %407 = vmatpush.bf16.msra.mxu0 %v321
        %408 = vmatpush.bf16.msra.mxu0 %v313
        %409 = vmatmul.bf16.gmra.mxu0 %v360
        %v410 = vpop.f32.mrf.mxu0
        %v411 = vadd.f32 0.0, %v410
        %v412 = vpop.f32.mrf.mxu0
        %413 = vdwg.mxu0
        %414 = vmatpush.bf16.msra.mxu0 0
        %415 = vmatpush.bf16.msra.mxu0 0
        %416 = vmatpush.bf16.msra.mxu0 0
        %417 = vmatpush.bf16.msra.mxu0 0
        %418 = vmatpush.bf16.msra.mxu0 0
        %419 = vmatpush.bf16.msra.mxu0 %v330
        %420 = vmatpush.bf16.msra.mxu0 %v322
        %421 = vmatpush.bf16.msra.mxu0 %v314
        %422 = vmatmul.bf16.gmra.mxu0 %v360
        %v423 = vpop.f32.mrf.mxu0
        %v424 = vadd.f32 0.0, %v423
        %v425 = vpop.f32.mrf.mxu0
        %426 = vdwg.mxu0
        %427 = vmatpush.bf16.msra.mxu0 0
        %428 = vmatpush.bf16.msra.mxu0 0
        %429 = vmatpush.bf16.msra.mxu0 0
        %430 = vmatpush.bf16.msra.mxu0 0
        %431 = vmatpush.bf16.msra.mxu0 0
        %432 = vmatpush.bf16.msra.mxu0 %v331
        %433 = vmatpush.bf16.msra.mxu0 %v323
        %434 = vmatpush.bf16.msra.mxu0 %v315
        %435 = vmatmul.bf16.gmra.mxu0 %v360
        %v436 = vpop.f32.mrf.mxu0
        %v437 = vadd.f32 0.0, %v436
        %v438 = vpop.f32.mrf.mxu0
        %439 = vdwg.mxu0
        %440 = vmatpush.bf16.msra.mxu0 0
        %441 = vmatpush.bf16.msra.mxu0 0
        %442 = vmatpush.bf16.msra.mxu0 0
        %443 = vmatpush.bf16.msra.mxu0 0
        %444 = vmatpush.bf16.msra.mxu0 0
        %445 = vmatpush.bf16.msra.mxu0 %v332
        %446 = vmatpush.bf16.msra.mxu0 %v324
        %447 = vmatpush.bf16.msra.mxu0 %v316
        %448 = vmatmul.bf16.gmra.mxu0 %v360
        %v449 = vpop.f32.mrf.mxu0
        %v450 = vadd.f32 0.0, %v449
        %v451 = vpop.f32.mrf.mxu0
        %452 = vdwg.mxu0
        %453 = vmatpush.bf16.msra.mxu0 0
        %454 = vmatpush.bf16.msra.mxu0 0
        %455 = vmatpush.bf16.msra.mxu0 0
        %456 = vmatpush.bf16.msra.mxu0 0
        %457 = vmatpush.bf16.msra.mxu0 0
        %458 = vmatpush.bf16.msra.mxu0 %v333
        %459 = vmatpush.bf16.msra.mxu0 %v325
        %460 = vmatpush.bf16.msra.mxu0 %v317
        %461 = vmatmul.bf16.gmra.mxu0 %v360
        %v462 = vpop.f32.mrf.mxu0
        %v463 = vadd.f32 0.0, %v462
        %v464 = vpop.f32.mrf.mxu0
        %465 = vdwg.mxu0
        %vm466 = vcmp.ge.f32.partialorder %v372, 0.0
        %vm467 = vcmp.ge.f32.partialorder %v385, 0.0
        %vm468 = vcmp.ge.f32.partialorder %v398, 0.0
        %vm469 = vcmp.ge.f32.partialorder %v411, 0.0
        %vm470 = vcmp.ge.f32.partialorder %v424, 0.0
        %vm471 = vcmp.ge.f32.partialorder %v437, 0.0
        %vm472 = vcmp.ge.f32.partialorder %v450, 0.0
        %vm473 = vcmp.ge.f32.partialorder %v463, 0.0
        %v474 = vmul.f32 %v372, 0.2
        %v475 = vmul.f32 %v385, 0.2
        %v476 = vmul.f32 %v398, 0.2
        %v477 = vmul.f32 %v411, 0.2
        %v478 = vmul.f32 %v424, 0.2
        %v479 = vmul.f32 %v437, 0.2
        %v480 = vmul.f32 %v450, 0.2
        %v481 = vmul.f32 %v463, 0.2
        %v482 = vsel %vm466, %v372, %v474
        %v483 = vsel %vm467, %v385, %v475
        %v484 = vsel %vm468, %v398, %v476
        %v485 = vsel %vm469, %v411, %v477
        %v486 = vsel %vm470, %v424, %v478
        %v487 = vsel %vm471, %v437, %v479
        %v488 = vsel %vm472, %v450, %v480
        %v489 = vsel %vm473, %v463, %v481
        %v490 = vpack.c.bf16 %v483, %v482
        %v491 = vpack.c.bf16 %v485, %v484
        %v492 = vpack.c.bf16 %v487, %v486
        %v493 = vpack.c.bf16 %v489, %v488
        %494 = vst [vmem:[%s210] sm:$0xff] %v490
        %495 = vst [vmem:[%s210 + $0x8] sm:$0xff] %v491
        %496 = vst [vmem:[%s210 + $0x10] sm:$0xff] %v492
        %497 = vst [vmem:[%s210 + $0x18] sm:$0xff] %v493
        %s498 = smul.u32 8, %s13
        %p499 = scmp.lt.s32.totalorder %s498, 15
        %s500 = scalar_select %p499, %s498, 15
        %s501 = smul.addr %s500, 4
        %s502 = scalar_lea.vmem %s2, %s501
        // Predicated region
        $region52: #{discriminator_forward.4} parent=46 // pred_check
          %p503 = pneg %p78
        $region53: #{discriminator_forward.4} parent=46 // pred_check_branch
          %505 = sbr.rel (%p503) target = $region55
        $region54: #{discriminator_forward.4} parent=46 // pred_region
          %s506 = smul.u32 8, %s13
        $region55: #{discriminator_forward.4} parent=46 // pred_fallthru
          _
      $region47: #{discriminator_forward.4} parent=5 // pred_fallthru
        _
      %p507 = scmp.le.s32.totalorder 2, %s8
      // Predicated region
      $region56: #{discriminator_forward.4} parent=5 // pred_check
        %p508 = pneg %p507
      $region57: #{discriminator_forward.4} parent=5 // pred_check_branch
        %510 = sbr.rel (%p508) target = $region59
      $region58: #{discriminator_forward.4} parent=5 // pred_region
        %s511 = ssub.s32 %s8, 2
        // Predicated region
        $region60: #{discriminator_forward.4} parent=58 // pred_check
          %p512 = pneg %p84
        $region61: #{discriminator_forward.4} parent=58 // pred_check_branch
          %514 = sbr.rel (%p512) target = $region63
        $region62: #{discriminator_forward.4} parent=58 // pred_region
          %s515 = smul.u32 8, %s14
          %p516 = scmp.lt.s32.totalorder %s515, 15
          %s517 = scalar_select %p516, %s515, 15
          %s518 = smul.addr %s517, 4
          %s519 = scalar_lea.vmem %s2, %s518
        $region63: #{discriminator_forward.4} parent=58 // pred_fallthru
          _
      $region59: #{discriminator_forward.4} parent=5 // pred_fallthru
        _
    $region6: #{discriminator_forward.4} parent=1 // loop_footer
      %s12 = sadd.s32 1, %s8
    $region7: #{discriminator_forward.4} parent=1 // loop_footer_branch
      %7 = sbr.rel target = $region3
    $region8: #{discriminator_forward.4} parent=1 // loop_exit
      _

// kernel: discriminator_forward.5
$region0: #{discriminator_forward.5}
  #allocation0 [shape = 'u32[]', space=smem, size = 0x4, offset = 0x4, fixed_abs, tag = 'smem constant byte address 0x4 - core index']
  #allocation1 [shape = 'u32[72,128]{1,0:T(1,128)}', space=vmem, size = 0x9000, scoped, tag = 'internal scratch']
  %s0 = inlined_call_operand.vmem [shape: bf16[16,128], index: 0, kind: input, shape index: {}]
  %s1 = inlined_call_operand.vmem [shape: bf16[128,512], index: 1, kind: input, shape index: {}]
  %s2 = inlined_call_operand.vmem [shape: f32[16,1], index: 2, kind: input, shape index: {}]
  %s3 = inlined_call_operand.vmem [shape: f32[16,1], index: 3, kind: input, shape index: {}]
  %s4 = inlined_call_operand.vmem [shape: bf16[16,512], index: 4, kind: output, shape index: {}]
  %s5 = sld [smem:[#allocation0]]
  $region26: #{discriminator_forward.5} parent=0
    _
  %s7 = ssub.s32 1, %s5
  %s8 = scalar_select 0, %s7, %s5
  // Predicated region
  $region2: #{discriminator_forward.5} parent=0 // pred_check
    _
  $region3: #{discriminator_forward.5} parent=0 // pred_check_branch
    %10 = sbr.rel (0) target = $region5
  $region4: #{discriminator_forward.5} parent=0 // pred_region
    _
  $region5: #{discriminator_forward.5} parent=0 // pred_fallthru
    _
  // Predicated region
  $region6: #{discriminator_forward.5} parent=0 // pred_check
    _
  $region7: #{discriminator_forward.5} parent=0 // pred_check_branch
    %12 = sbr.rel (0) target = $region9
  $region8: #{discriminator_forward.5} parent=0 // pred_region
    _
  $region9: #{discriminator_forward.5} parent=0 // pred_fallthru
    _
  // Predicated region
  $region10: #{discriminator_forward.5} parent=0 // pred_check
    _
  $region11: #{discriminator_forward.5} parent=0 // pred_check_branch
    %14 = sbr.rel (0) target = $region13
  $region12: #{discriminator_forward.5} parent=0 // pred_region
    _
  $region13: #{discriminator_forward.5} parent=0 // pred_fallthru
    _
  // Predicated region
  $region14: #{discriminator_forward.5} parent=0 // pred_check
    _
  $region15: #{discriminator_forward.5} parent=0 // pred_check_branch
    %16 = sbr.rel (0) target = $region17
  $region16: #{discriminator_forward.5} parent=0 // pred_region
    _
  $region17: #{discriminator_forward.5} parent=0 // pred_fallthru
    _
  %v17 = vld [vmem:[%s0] sm:$0xf]
  %v18 = vld [vmem:[%s0 + $0x4] sm:$0xf]
  %v19 = vld [vmem:[%s1] sm:$0xff]
  %v20 = vld [vmem:[%s1 + $0x8] sm:$0xff]
  %v21 = vld [vmem:[%s1 + $0x10] sm:$0xff]
  %v22 = vld [vmem:[%s1 + $0x18] sm:$0xff]
  %v23 = vld [vmem:[%s1 + $0x20] sm:$0xff]
  %v24 = vld [vmem:[%s1 + $0x28] sm:$0xff]
  %v25 = vld [vmem:[%s1 + $0x30] sm:$0xff]
  %v26 = vld [vmem:[%s1 + $0x38] sm:$0xff]
  %v27 = vld [vmem:[%s1 + $0x40] sm:$0xff]
  %v28 = vld [vmem:[%s1 + $0x48] sm:$0xff]
  %v29 = vld [vmem:[%s1 + $0x50] sm:$0xff]
  %v30 = vld [vmem:[%s1 + $0x58] sm:$0xff]
  %v31 = vld [vmem:[%s1 + $0x60] sm:$0xff]
  %v32 = vld [vmem:[%s1 + $0x68] sm:$0xff]
  %v33 = vld [vmem:[%s1 + $0x70] sm:$0xff]
  %v34 = vld [vmem:[%s1 + $0x78] sm:$0xff]
  %v35 = vld [vmem:[%s1 + $0x80] sm:$0xff]
  %v36 = vld [vmem:[%s1 + $0x88] sm:$0xff]
  %v37 = vld [vmem:[%s1 + $0x90] sm:$0xff]
  %v38 = vld [vmem:[%s1 + $0x98] sm:$0xff]
  %v39 = vld [vmem:[%s1 + $0xa0] sm:$0xff]
  %v40 = vld [vmem:[%s1 + $0xa8] sm:$0xff]
  %v41 = vld [vmem:[%s1 + $0xb0] sm:$0xff]
  %v42 = vld [vmem:[%s1 + $0xb8] sm:$0xff]
  %v43 = vld [vmem:[%s1 + $0xc0] sm:$0xff]
  %v44 = vld [vmem:[%s1 + $0xc8] sm:$0xff]
  %v45 = vld [vmem:[%s1 + $0xd0] sm:$0xff]
  %v46 = vld [vmem:[%s1 + $0xd8] sm:$0xff]
  %v47 = vld [vmem:[%s1 + $0xe0] sm:$0xff]
  %v48 = vld [vmem:[%s1 + $0xe8] sm:$0xff]
  %v49 = vld [vmem:[%s1 + $0xf0] sm:$0xff]
  %v50 = vld [vmem:[%s1 + $0xf8] sm:$0xff]
  %v53 = vunpack.c.l.b16 %v17
  %v54 = vunpack.c.l.b16 %v18
  %v55 = vpack.c.b16 %v54, %v53
  %v89 = vunpack.c.l.b16 %v19
  %v90 = vunpack.c.h.b16 %v19
  %v91 = vunpack.c.l.b16 %v20
  %v92 = vunpack.c.h.b16 %v20
  %v93 = vunpack.c.l.b16 %v21
  %v94 = vunpack.c.h.b16 %v21
  %v95 = vunpack.c.l.b16 %v22
  %v96 = vunpack.c.h.b16 %v22
  %v97 = vunpack.c.l.b16 %v23
  %v98 = vunpack.c.h.b16 %v23
  %v99 = vunpack.c.l.b16 %v24
  %v100 = vunpack.c.h.b16 %v24
  %v101 = vunpack.c.l.b16 %v25
  %v102 = vunpack.c.h.b16 %v25
  %v103 = vunpack.c.l.b16 %v26
  %v104 = vunpack.c.h.b16 %v26
  %v105 = vunpack.c.l.b16 %v27
  %v106 = vunpack.c.h.b16 %v27
  %v107 = vunpack.c.l.b16 %v28
  %v108 = vunpack.c.h.b16 %v28
  %v109 = vunpack.c.l.b16 %v29
  %v110 = vunpack.c.h.b16 %v29
  %v111 = vunpack.c.l.b16 %v30
  %v112 = vunpack.c.h.b16 %v30
  %v113 = vunpack.c.l.b16 %v31
  %v114 = vunpack.c.h.b16 %v31
  %v115 = vunpack.c.l.b16 %v32
  %v116 = vunpack.c.h.b16 %v32
  %v117 = vunpack.c.l.b16 %v33
  %v118 = vunpack.c.h.b16 %v33
  %v119 = vunpack.c.l.b16 %v34
  %v120 = vunpack.c.h.b16 %v34
  %v121 = vunpack.c.l.b16 %v35
  %v122 = vunpack.c.h.b16 %v35
  %v123 = vunpack.c.l.b16 %v36
  %v124 = vunpack.c.h.b16 %v36
  %v125 = vunpack.c.l.b16 %v37
  %v126 = vunpack.c.h.b16 %v37
  %v127 = vunpack.c.l.b16 %v38
  %v128 = vunpack.c.h.b16 %v38
  %v129 = vunpack.c.l.b16 %v39
  %v130 = vunpack.c.h.b16 %v39
  %v131 = vunpack.c.l.b16 %v40
  %v132 = vunpack.c.h.b16 %v40
  %v133 = vunpack.c.l.b16 %v41
  %v134 = vunpack.c.h.b16 %v41
  %v135 = vunpack.c.l.b16 %v42
  %v136 = vunpack.c.h.b16 %v42
  %v137 = vunpack.c.l.b16 %v43
  %v138 = vunpack.c.h.b16 %v43
  %v139 = vunpack.c.l.b16 %v44
  %v140 = vunpack.c.h.b16 %v44
  %v141 = vunpack.c.l.b16 %v45
  %v142 = vunpack.c.h.b16 %v45
  %v143 = vunpack.c.l.b16 %v46
  %v144 = vunpack.c.h.b16 %v46
  %v145 = vunpack.c.l.b16 %v47
  %v146 = vunpack.c.h.b16 %v47
  %v147 = vunpack.c.l.b16 %v48
  %v148 = vunpack.c.h.b16 %v48
  %v149 = vunpack.c.l.b16 %v49
  %v150 = vunpack.c.h.b16 %v49
  %v151 = vunpack.c.l.b16 %v50
  %v152 = vunpack.c.h.b16 %v50
  %v153 = vpack.c.b16 %v93, %v89
  %v154 = vpack.c.b16 %v94, %v90
  %v155 = vpack.c.b16 %v95, %v91
  %v156 = vpack.c.b16 %v96, %v92
  %v157 = vpack.c.b16 %v101, %v97
  %v158 = vpack.c.b16 %v102, %v98
  %v159 = vpack.c.b16 %v103, %v99
  %v160 = vpack.c.b16 %v104, %v100
  %v161 = vpack.c.b16 %v109, %v105
  %v162 = vpack.c.b16 %v110, %v106
  %v163 = vpack.c.b16 %v111, %v107
  %v164 = vpack.c.b16 %v112, %v108
  %v165 = vpack.c.b16 %v117, %v113
  %v166 = vpack.c.b16 %v118, %v114
  %v167 = vpack.c.b16 %v119, %v115
  %v168 = vpack.c.b16 %v120, %v116
  %v169 = vpack.c.b16 %v125, %v121
  %v170 = vpack.c.b16 %v126, %v122
  %v171 = vpack.c.b16 %v127, %v123
  %v172 = vpack.c.b16 %v128, %v124
  %v173 = vpack.c.b16 %v133, %v129
  %v174 = vpack.c.b16 %v134, %v130
  %v175 = vpack.c.b16 %v135, %v131
  %v176 = vpack.c.b16 %v136, %v132
  %v177 = vpack.c.b16 %v141, %v137
  %v178 = vpack.c.b16 %v142, %v138
  %v179 = vpack.c.b16 %v143, %v139
  %v180 = vpack.c.b16 %v144, %v140
  %v181 = vpack.c.b16 %v149, %v145
  %v182 = vpack.c.b16 %v150, %v146
  %v183 = vpack.c.b16 %v151, %v147
  %v184 = vpack.c.b16 %v152, %v148
  %217 = vmatpush.bf16.msra.mxu0 %v181
  %218 = vmatpush.bf16.msra.mxu0 %v177
  %219 = vmatpush.bf16.msra.mxu0 %v173
  %220 = vmatpush.bf16.msra.mxu0 %v169
  %221 = vmatpush.bf16.msra.mxu0 %v165
  %222 = vmatpush.bf16.msra.mxu0 %v161
  %223 = vmatpush.bf16.msra.mxu0 %v157
  %224 = vmatpush.bf16.msra.mxu0 %v153
  %225 = vmatmul.bf16.gmra.mxu0 %v55
  %v226 = vpop.f32.mrf.mxu0
  %v227 = vadd.f32 0.0, %v226
  %v228 = vpop.f32.mrf.mxu0
  %v229 = vadd.f32 0.0, %v228
  %230 = vdwg.mxu0
  %231 = vmatpush.bf16.msra.mxu0 %v182
  %232 = vmatpush.bf16.msra.mxu0 %v178
  %233 = vmatpush.bf16.msra.mxu0 %v174
  %234 = vmatpush.bf16.msra.mxu0 %v170
  %235 = vmatpush.bf16.msra.mxu0 %v166
  %236 = vmatpush.bf16.msra.mxu0 %v162
  %237 = vmatpush.bf16.msra.mxu0 %v158
  %238 = vmatpush.bf16.msra.mxu0 %v154
  %239 = vmatmul.bf16.gmra.mxu0 %v55
  %v240 = vpop.f32.mrf.mxu0
  %v241 = vadd.f32 0.0, %v240
  %v242 = vpop.f32.mrf.mxu0
  %v243 = vadd.f32 0.0, %v242
  %244 = vdwg.mxu0
  %245 = vmatpush.bf16.msra.mxu0 %v183
  %246 = vmatpush.bf16.msra.mxu0 %v179
  %247 = vmatpush.bf16.msra.mxu0 %v175
  %248 = vmatpush.bf16.msra.mxu0 %v171
  %249 = vmatpush.bf16.msra.mxu0 %v167
  %250 = vmatpush.bf16.msra.mxu0 %v163
  %251 = vmatpush.bf16.msra.mxu0 %v159
  %252 = vmatpush.bf16.msra.mxu0 %v155
  %253 = vmatmul.bf16.gmra.mxu0 %v55
  %v254 = vpop.f32.mrf.mxu0
  %v255 = vadd.f32 0.0, %v254
  %v256 = vpop.f32.mrf.mxu0
  %v257 = vadd.f32 0.0, %v256
  %258 = vdwg.mxu0
  %259 = vmatpush.bf16.msra.mxu0 %v184
  %260 = vmatpush.bf16.msra.mxu0 %v180
  %261 = vmatpush.bf16.msra.mxu0 %v176
  %262 = vmatpush.bf16.msra.mxu0 %v172
  %263 = vmatpush.bf16.msra.mxu0 %v168
  %264 = vmatpush.bf16.msra.mxu0 %v164
  %265 = vmatpush.bf16.msra.mxu0 %v160
  %266 = vmatpush.bf16.msra.mxu0 %v156
  %267 = vmatmul.bf16.gmra.mxu0 %v55
  %v268 = vpop.f32.mrf.mxu0
  %v269 = vadd.f32 0.0, %v268
  %v270 = vpop.f32.mrf.mxu0
  %v271 = vadd.f32 0.0, %v270
  %272 = vdwg.mxu0
  %v273 = vadd.f32 %v227, %v241
  %v274 = vadd.f32 %v273, %v255
  %v275 = vadd.f32 %v274, %v269
  %276 = vadd.xlane.f32.xlu0 %v275
  %v277 = vpop.xlane.xlu0 %276
  %v278 = vadd.f32 %v229, %v243
  %v279 = vadd.f32 %v278, %v257
  %v280 = vadd.f32 %v279, %v271
  %281 = vadd.xlane.f32.xlu0 %v280
  %v282 = vpop.xlane.xlu0 %281
  %v283 = vmul.f32 %v277, 0.001953125
  %v284 = vmul.f32 %v282, 0.001953125
  %v285 = vsub.f32 %v227, %v283
  %v286 = vsub.f32 %v241, %v283
  %v287 = vsub.f32 %v255, %v283
  %v288 = vsub.f32 %v269, %v283
  %v289 = vsub.f32 %v229, %v284
  %v290 = vsub.f32 %v243, %v284
  %v291 = vsub.f32 %v257, %v284
  %v292 = vsub.f32 %v271, %v284
  %v293 = vmul.f32 %v285, %v285
  %v294 = vmul.f32 %v286, %v286
  %v295 = vmul.f32 %v287, %v287
  %v296 = vmul.f32 %v288, %v288
  %v297 = vmul.f32 %v289, %v289
  %v298 = vmul.f32 %v290, %v290
  %v299 = vmul.f32 %v291, %v291
  %v300 = vmul.f32 %v292, %v292
  %v301 = vadd.f32 %v293, %v294
  %v302 = vadd.f32 %v301, %v295
  %v303 = vadd.f32 %v302, %v296
  %304 = vadd.xlane.f32.xlu0 %v303
  %v305 = vpop.xlane.xlu0 %304
  %v306 = vadd.f32 %v297, %v298
  %v307 = vadd.f32 %v306, %v299
  %v308 = vadd.f32 %v307, %v300
  %309 = vadd.xlane.f32.xlu0 %v308
  %v310 = vpop.xlane.xlu0 %309
  %v311 = vmul.f32 %v305, 0.001953125
  %v312 = vmul.f32 %v310, 0.001953125
  %v313 = vld [vmem:[%s2] sm:$0xff]
  %v314 = vld [vmem:[%s2 + $0x8] sm:$0xff]
  %v315 = vadd.f32 %v311, 1e-05
  %v316 = vadd.f32 %v312, 1e-05
  %v317 = vrsqrt.pop %v315
  %v318 = vmul.f32 %v317, %v315
  %v319 = vmul.f32 %v318, %v317
  %v320 = vmul.f32 0.5, %v319
  %v321 = vsub.f32 1.5, %v320
  %v322 = vmul.f32 %v317, %v321
  %vm323 = vweird.f32 %v315
  %vm324 = vweird.f32 %v317
  %vm325 = vmor %vm323, %vm324
  %v326 = vsel %vm325, %v317, %v322
  %v327 = vrsqrt.pop %v316
  %v328 = vmul.f32 %v327, %v316
  %v329 = vmul.f32 %v328, %v327
  %v330 = vmul.f32 0.5, %v329
  %v331 = vsub.f32 1.5, %v330
  %v332 = vmul.f32 %v327, %v331
  %vm333 = vweird.f32 %v316
  %vm334 = vweird.f32 %v327
  %vm335 = vmor %vm333, %vm334
  %v336 = vsel %vm335, %v327, %v332
  %v337 = vmul.f32 %v313, %v326
  %v338 = vmul.f32 %v314, %v336
  %340 = vset.pattern.permute.xlu0 0
  %341 = vperm.xlu0 %340, %v337
  %v342 = vpop.permute.xlu0 %341
  %345 = vset.pattern.permute.xlu0 0
  %346 = vperm.xlu0 %345, %v338
  %v347 = vpop.permute.xlu0 %346
  %v349 = vmul.f32 %v285, %v342
  %v350 = vmul.f32 %v286, %v342
  %v351 = vmul.f32 %v287, %v342
  %v352 = vmul.f32 %v288, %v342
  %v353 = vmul.f32 %v289, %v347
  %v354 = vmul.f32 %v290, %v347
  %v355 = vmul.f32 %v291, %v347
  %v356 = vmul.f32 %v292, %v347
  %v357 = vld [vmem:[%s3] sm:$0xff]
  %v358 = vld [vmem:[%s3 + $0x8] sm:$0xff]
  %360 = vset.pattern.permute.xlu0 0
  %361 = vperm.xlu0 %360, %v357
  %v362 = vpop.permute.xlu0 %361
  %365 = vset.pattern.permute.xlu0 0
  %366 = vperm.xlu0 %365, %v358
  %v367 = vpop.permute.xlu0 %366
  %v369 = vadd.f32 %v349, %v362
  %v370 = vadd.f32 %v350, %v362
  %v371 = vadd.f32 %v351, %v362
  %v372 = vadd.f32 %v352, %v362
  %v373 = vadd.f32 %v353, %v367
  %v374 = vadd.f32 %v354, %v367
  %v375 = vadd.f32 %v355, %v367
  %v376 = vadd.f32 %v356, %v367
  %vm377 = vcmp.ge.f32.partialorder %v369, 0.0
  %vm378 = vcmp.ge.f32.partialorder %v370, 0.0
  %vm379 = vcmp.ge.f32.partialorder %v371, 0.0
  %vm380 = vcmp.ge.f32.partialorder %v372, 0.0
  %vm381 = vcmp.ge.f32.partialorder %v373, 0.0
  %vm382 = vcmp.ge.f32.partialorder %v374, 0.0
  %vm383 = vcmp.ge.f32.partialorder %v375, 0.0
  %vm384 = vcmp.ge.f32.partialorder %v376, 0.0
  %v385 = vmul.f32 %v369, 0.2
  %v386 = vmul.f32 %v370, 0.2
  %v387 = vmul.f32 %v371, 0.2
  %v388 = vmul.f32 %v372, 0.2
  %v389 = vmul.f32 %v373, 0.2
  %v390 = vmul.f32 %v374, 0.2
  %v391 = vmul.f32 %v375, 0.2
  %v392 = vmul.f32 %v376, 0.2
  %v393 = vsel %vm377, %v369, %v385
  %v394 = vsel %vm378, %v370, %v386
  %v395 = vsel %vm379, %v371, %v387
  %v396 = vsel %vm380, %v372, %v388
  %v397 = vsel %vm381, %v373, %v389
  %v398 = vsel %vm382, %v374, %v390
  %v399 = vsel %vm383, %v375, %v391
  %v400 = vsel %vm384, %v376, %v392
  %v401 = vpack.c.bf16 %v394, %v393
  %v402 = vpack.c.bf16 %v396, %v395
  %v403 = vpack.c.bf16 %v398, %v397
  %v404 = vpack.c.bf16 %v400, %v399
  %405 = vst [vmem:[%s4] sm:$0xff] %v401
  %406 = vst [vmem:[%s4 + $0x8] sm:$0xff] %v402
  %407 = vst [vmem:[%s4 + $0x10] sm:$0xff] %v403
  %408 = vst [vmem:[%s4 + $0x18] sm:$0xff] %v404
  // Predicated region
  $region18: #{discriminator_forward.5} parent=0 // pred_check
    _
  $region19: #{discriminator_forward.5} parent=0 // pred_check_branch
    %410 = sbr.rel (0) target = $region21
  $region20: #{discriminator_forward.5} parent=0 // pred_region
    _
  $region21: #{discriminator_forward.5} parent=0 // pred_fallthru
    _
  // Predicated region
  $region22: #{discriminator_forward.5} parent=0 // pred_check
    _
  $region23: #{discriminator_forward.5} parent=0 // pred_check_branch
    %412 = sbr.rel (0) target = $region25
  $region24: #{discriminator_forward.5} parent=0 // pred_region
    _
  $region25: #{discriminator_forward.5} parent=0 // pred_fallthru
    _

// kernel: discriminator_forward.6
$region0: #{discriminator_forward.6}
  #allocation0 [shape = 'u32[]', space=smem, size = 0x4, offset = 0x4, fixed_abs, tag = 'smem constant byte address 0x4 - core index']
  #allocation1 [shape = 'u32[72,128]{1,0:T(1,128)}', space=vmem, size = 0x9000, scoped, tag = 'internal scratch']
  %s0 = inlined_call_operand.vmem [shape: bf16[32,256], index: 0, kind: input, shape index: {}]
  %s1 = inlined_call_operand.vmem [shape: bf16[256,128], index: 1, kind: input, shape index: {}]
  %s2 = inlined_call_operand.vmem [shape: f32[32,1], index: 2, kind: input, shape index: {}]
  %s3 = inlined_call_operand.vmem [shape: f32[32,1], index: 3, kind: input, shape index: {}]
  %s4 = inlined_call_operand.vmem [shape: bf16[32,128], index: 4, kind: output, shape index: {}]
  %s5 = sld [smem:[#allocation0]]
  $region26: #{discriminator_forward.6} parent=0
    _
  %s7 = ssub.s32 1, %s5
  %s8 = scalar_select 0, %s7, %s5
  // Predicated region
  $region2: #{discriminator_forward.6} parent=0 // pred_check
    _
  $region3: #{discriminator_forward.6} parent=0 // pred_check_branch
    %10 = sbr.rel (0) target = $region5
  $region4: #{discriminator_forward.6} parent=0 // pred_region
    _
  $region5: #{discriminator_forward.6} parent=0 // pred_fallthru
    _
  // Predicated region
  $region6: #{discriminator_forward.6} parent=0 // pred_check
    _
  $region7: #{discriminator_forward.6} parent=0 // pred_check_branch
    %12 = sbr.rel (0) target = $region9
  $region8: #{discriminator_forward.6} parent=0 // pred_region
    _
  $region9: #{discriminator_forward.6} parent=0 // pred_fallthru
    _
  // Predicated region
  $region10: #{discriminator_forward.6} parent=0 // pred_check
    _
  $region11: #{discriminator_forward.6} parent=0 // pred_check_branch
    %14 = sbr.rel (0) target = $region13
  $region12: #{discriminator_forward.6} parent=0 // pred_region
    _
  $region13: #{discriminator_forward.6} parent=0 // pred_fallthru
    _
  // Predicated region
  $region14: #{discriminator_forward.6} parent=0 // pred_check
    _
  $region15: #{discriminator_forward.6} parent=0 // pred_check_branch
    %16 = sbr.rel (0) target = $region17
  $region16: #{discriminator_forward.6} parent=0 // pred_region
    _
  $region17: #{discriminator_forward.6} parent=0 // pred_fallthru
    _
  %v17 = vld [vmem:[%s0] sm:$0xff]
  %v18 = vld [vmem:[%s0 + $0x8] sm:$0xff]
  %v19 = vld [vmem:[%s0 + $0x10] sm:$0xff]
  %v20 = vld [vmem:[%s0 + $0x18] sm:$0xff]
  %v21 = vld [vmem:[%s1] sm:$0xf]
  %v22 = vld [vmem:[%s1 + $0x4] sm:$0xf]
  %v23 = vld [vmem:[%s1 + $0x8] sm:$0xf]
  %v24 = vld [vmem:[%s1 + $0xc] sm:$0xf]
  %v25 = vld [vmem:[%s1 + $0x10] sm:$0xf]
  %v26 = vld [vmem:[%s1 + $0x14] sm:$0xf]
  %v27 = vld [vmem:[%s1 + $0x18] sm:$0xf]
  %v28 = vld [vmem:[%s1 + $0x1c] sm:$0xf]
  %v29 = vld [vmem:[%s1 + $0x20] sm:$0xf]
  %v30 = vld [vmem:[%s1 + $0x24] sm:$0xf]
  %v31 = vld [vmem:[%s1 + $0x28] sm:$0xf]
  %v32 = vld [vmem:[%s1 + $0x2c] sm:$0xf]
  %v33 = vld [vmem:[%s1 + $0x30] sm:$0xf]
  %v34 = vld [vmem:[%s1 + $0x34] sm:$0xf]
  %v35 = vld [vmem:[%s1 + $0x38] sm:$0xf]
  %v36 = vld [vmem:[%s1 + $0x3c] sm:$0xf]
  %v37 = vld [vmem:[%s1 + $0x40] sm:$0xf]
  %v38 = vld [vmem:[%s1 + $0x44] sm:$0xf]
  %v39 = vld [vmem:[%s1 + $0x48] sm:$0xf]
  %v40 = vld [vmem:[%s1 + $0x4c] sm:$0xf]
  %v41 = vld [vmem:[%s1 + $0x50] sm:$0xf]
  %v42 = vld [vmem:[%s1 + $0x54] sm:$0xf]
  %v43 = vld [vmem:[%s1 + $0x58] sm:$0xf]
  %v44 = vld [vmem:[%s1 + $0x5c] sm:$0xf]
  %v45 = vld [vmem:[%s1 + $0x60] sm:$0xf]
  %v46 = vld [vmem:[%s1 + $0x64] sm:$0xf]
  %v47 = vld [vmem:[%s1 + $0x68] sm:$0xf]
  %v48 = vld [vmem:[%s1 + $0x6c] sm:$0xf]
  %v49 = vld [vmem:[%s1 + $0x70] sm:$0xf]
  %v50 = vld [vmem:[%s1 + $0x74] sm:$0xf]
  %v51 = vld [vmem:[%s1 + $0x78] sm:$0xf]
  %v52 = vld [vmem:[%s1 + $0x7c] sm:$0xf]
  %v57 = vunpack.c.l.b16 %v17
  %v58 = vunpack.c.h.b16 %v17
  %v59 = vunpack.c.l.b16 %v18
  %v60 = vunpack.c.h.b16 %v18
  %v61 = vunpack.c.l.b16 %v19
  %v62 = vunpack.c.h.b16 %v19
  %v63 = vunpack.c.l.b16 %v20
  %v64 = vunpack.c.h.b16 %v20
  %v65 = vpack.c.b16 %v59, %v57
  %v66 = vpack.c.b16 %v60, %v58
  %v67 = vpack.c.b16 %v63, %v61
  %v68 = vpack.c.b16 %v64, %v62
  %v105 = vunpack.c.l.b16 %v21
  %v106 = vunpack.c.l.b16 %v22
  %v107 = vunpack.c.l.b16 %v23
  %v108 = vunpack.c.l.b16 %v24
  %v109 = vunpack.c.l.b16 %v25
  %v110 = vunpack.c.l.b16 %v26
  %v111 = vunpack.c.l.b16 %v27
  %v112 = vunpack.c.l.b16 %v28
  %v113 = vunpack.c.l.b16 %v29
  %v114 = vunpack.c.l.b16 %v30
  %v115 = vunpack.c.l.b16 %v31
  %v116 = vunpack.c.l.b16 %v32
  %v117 = vunpack.c.l.b16 %v33
  %v118 = vunpack.c.l.b16 %v34
  %v119 = vunpack.c.l.b16 %v35
  %v120 = vunpack.c.l.b16 %v36
  %v121 = vunpack.c.l.b16 %v37
  %v122 = vunpack.c.l.b16 %v38
  %v123 = vunpack.c.l.b16 %v39
  %v124 = vunpack.c.l.b16 %v40
  %v125 = vunpack.c.l.b16 %v41
  %v126 = vunpack.c.l.b16 %v42
  %v127 = vunpack.c.l.b16 %v43
  %v128 = vunpack.c.l.b16 %v44
  %v129 = vunpack.c.l.b16 %v45
  %v130 = vunpack.c.l.b16 %v46
  %v131 = vunpack.c.l.b16 %v47
  %v132 = vunpack.c.l.b16 %v48
  %v133 = vunpack.c.l.b16 %v49
  %v134 = vunpack.c.l.b16 %v50
  %v135 = vunpack.c.l.b16 %v51
  %v136 = vunpack.c.l.b16 %v52
  %v137 = vpack.c.b16 %v106, %v105
  %v138 = vpack.c.b16 %v108, %v107
  %v139 = vpack.c.b16 %v110, %v109
  %v140 = vpack.c.b16 %v112, %v111
  %v141 = vpack.c.b16 %v114, %v113
  %v142 = vpack.c.b16 %v116, %v115
  %v143 = vpack.c.b16 %v118, %v117
  %v144 = vpack.c.b16 %v120, %v119
  %v145 = vpack.c.b16 %v122, %v121
  %v146 = vpack.c.b16 %v124, %v123
  %v147 = vpack.c.b16 %v126, %v125
  %v148 = vpack.c.b16 %v128, %v127
  %v149 = vpack.c.b16 %v130, %v129
  %v150 = vpack.c.b16 %v132, %v131
  %v151 = vpack.c.b16 %v134, %v133
  %v152 = vpack.c.b16 %v136, %v135
  %169 = vmatpush.bf16.msra.mxu0 %v144
  %170 = vmatpush.bf16.msra.mxu0 %v143
  %171 = vmatpush.bf16.msra.mxu0 %v142
  %172 = vmatpush.bf16.msra.mxu0 %v141
  %173 = vmatpush.bf16.msra.mxu0 %v140
  %174 = vmatpush.bf16.msra.mxu0 %v139
  %175 = vmatpush.bf16.msra.mxu0 %v138
  %176 = vmatpush.bf16.msra.mxu0 %v137
  %177 = vmatmul.bf16.gmra.mxu0 %v65
  %v178 = vpop.f32.mrf.mxu0
  %v179 = vadd.f32 0.0, %v178
  %v180 = vpop.f32.mrf.mxu0
  %v181 = vadd.f32 0.0, %v180
  %182 = vmatmul.bf16.gmra.mxu0 %v67
  %v183 = vpop.f32.mrf.mxu0
  %v184 = vadd.f32 0.0, %v183
  %v185 = vpop.f32.mrf.mxu0
  %v186 = vadd.f32 0.0, %v185
  %187 = vdwg.mxu0
  %188 = vmatpush.bf16.msra.mxu0 %v152
  %189 = vmatpush.bf16.msra.mxu0 %v151
  %190 = vmatpush.bf16.msra.mxu0 %v150
  %191 = vmatpush.bf16.msra.mxu0 %v149
  %192 = vmatpush.bf16.msra.mxu0 %v148
  %193 = vmatpush.bf16.msra.mxu0 %v147
  %194 = vmatpush.bf16.msra.mxu0 %v146
  %195 = vmatpush.bf16.msra.mxu0 %v145
  %196 = vmatmul.bf16.gmra.mxu0 %v66
  %v197 = vpop.f32.mrf.mxu0
  %v198 = vadd.f32 %v179, %v197
  %v199 = vpop.f32.mrf.mxu0
  %v200 = vadd.f32 %v181, %v199
  %201 = vmatmul.bf16.gmra.mxu0 %v68
  %v202 = vpop.f32.mrf.mxu0
  %v203 = vadd.f32 %v184, %v202
  %v204 = vpop.f32.mrf.mxu0
  %v205 = vadd.f32 %v186, %v204
  %206 = vdwg.mxu0
  %207 = vadd.xlane.f32.xlu0 %v198
  %v208 = vpop.xlane.xlu0 %207
  %209 = vadd.xlane.f32.xlu0 %v200
  %v210 = vpop.xlane.xlu0 %209
  %211 = vadd.xlane.f32.xlu0 %v203
  %v212 = vpop.xlane.xlu0 %211
  %213 = vadd.xlane.f32.xlu0 %v205
  %v214 = vpop.xlane.xlu0 %213
  %v215 = vmul.f32 %v208, 0.0078125
  %v216 = vmul.f32 %v210, 0.0078125
  %v217 = vmul.f32 %v212, 0.0078125
  %v218 = vmul.f32 %v214, 0.0078125
  %v219 = vsub.f32 %v198, %v215
  %v220 = vsub.f32 %v200, %v216
  %v221 = vsub.f32 %v203, %v217
  %v222 = vsub.f32 %v205, %v218
  %v223 = vmul.f32 %v219, %v219
  %v224 = vmul.f32 %v220, %v220
  %v225 = vmul.f32 %v221, %v221
  %v226 = vmul.f32 %v222, %v222
  %227 = vadd.xlane.f32.xlu0 %v223
  %v228 = vpop.xlane.xlu0 %227
  %229 = vadd.xlane.f32.xlu0 %v224
  %v230 = vpop.xlane.xlu0 %229
  %231 = vadd.xlane.f32.xlu0 %v225
  %v232 = vpop.xlane.xlu0 %231
  %233 = vadd.xlane.f32.xlu0 %v226
  %v234 = vpop.xlane.xlu0 %233
  %v235 = vmul.f32 %v228, 0.0078125
  %v236 = vmul.f32 %v230, 0.0078125
  %v237 = vmul.f32 %v232, 0.0078125
  %v238 = vmul.f32 %v234, 0.0078125
  %v239 = vld [vmem:[%s2] sm:$0xff]
  %v240 = vld [vmem:[%s2 + $0x8] sm:$0xff]
  %v241 = vld [vmem:[%s2 + $0x10] sm:$0xff]
  %v242 = vld [vmem:[%s2 + $0x18] sm:$0xff]
  %v243 = vadd.f32 %v235, 1e-05
  %v244 = vadd.f32 %v236, 1e-05
  %v245 = vadd.f32 %v237, 1e-05
  %v246 = vadd.f32 %v238, 1e-05
  %v247 = vrsqrt.pop %v243
  %v248 = vmul.f32 %v247, %v243
  %v249 = vmul.f32 %v248, %v247
  %v250 = vmul.f32 0.5, %v249
  %v251 = vsub.f32 1.5, %v250
  %v252 = vmul.f32 %v247, %v251
  %vm253 = vweird.f32 %v243
  %vm254 = vweird.f32 %v247
  %vm255 = vmor %vm253, %vm254
  %v256 = vsel %vm255, %v247, %v252
  %v257 = vrsqrt.pop %v244
  %v258 = vmul.f32 %v257, %v244
  %v259 = vmul.f32 %v258, %v257
  %v260 = vmul.f32 0.5, %v259
  %v261 = vsub.f32 1.5, %v260
  %v262 = vmul.f32 %v257, %v261
  %vm263 = vweird.f32 %v244
  %vm264 = vweird.f32 %v257
  %vm265 = vmor %vm263, %vm264
  %v266 = vsel %vm265, %v257, %v262
  %v267 = vrsqrt.pop %v245
  %v268 = vmul.f32 %v267, %v245
  %v269 = vmul.f32 %v268, %v267
  %v270 = vmul.f32 0.5, %v269
  %v271 = vsub.f32 1.5, %v270
  %v272 = vmul.f32 %v267, %v271
  %vm273 = vweird.f32 %v245
  %vm274 = vweird.f32 %v267
  %vm275 = vmor %vm273, %vm274
  %v276 = vsel %vm275, %v267, %v272
  %v277 = vrsqrt.pop %v246
  %v278 = vmul.f32 %v277, %v246
  %v279 = vmul.f32 %v278, %v277
  %v280 = vmul.f32 0.5, %v279
  %v281 = vsub.f32 1.5, %v280
  %v282 = vmul.f32 %v277, %v281
  %vm283 = vweird.f32 %v246
  %vm284 = vweird.f32 %v277
  %vm285 = vmor %vm283, %vm284
  %v286 = vsel %vm285, %v277, %v282
  %v287 = vmul.f32 %v239, %v256
  %v288 = vmul.f32 %v240, %v266
  %v289 = vmul.f32 %v241, %v276
  %v290 = vmul.f32 %v242, %v286
  %292 = vset.pattern.permute.xlu0 0
  %293 = vperm.xlu0 %292, %v287
  %v294 = vpop.permute.xlu0 %293
  %297 = vset.pattern.permute.xlu0 0
  %298 = vperm.xlu0 %297, %v288
  %v299 = vpop.permute.xlu0 %298
  %302 = vset.pattern.permute.xlu0 0
  %303 = vperm.xlu0 %302, %v289
  %v304 = vpop.permute.xlu0 %303
  %307 = vset.pattern.permute.xlu0 0
  %308 = vperm.xlu0 %307, %v290
  %v309 = vpop.permute.xlu0 %308
  %v311 = vmul.f32 %v219, %v294
  %v312 = vmul.f32 %v220, %v299
  %v313 = vmul.f32 %v221, %v304
  %v314 = vmul.f32 %v222, %v309
  %v315 = vld [vmem:[%s3] sm:$0xff]
  %v316 = vld [vmem:[%s3 + $0x8] sm:$0xff]
  %v317 = vld [vmem:[%s3 + $0x10] sm:$0xff]
  %v318 = vld [vmem:[%s3 + $0x18] sm:$0xff]
  %320 = vset.pattern.permute.xlu0 0
  %321 = vperm.xlu0 %320, %v315
  %v322 = vpop.permute.xlu0 %321
  %325 = vset.pattern.permute.xlu0 0
  %326 = vperm.xlu0 %325, %v316
  %v327 = vpop.permute.xlu0 %326
  %330 = vset.pattern.permute.xlu0 0
  %331 = vperm.xlu0 %330, %v317
  %v332 = vpop.permute.xlu0 %331
  %335 = vset.pattern.permute.xlu0 0
  %336 = vperm.xlu0 %335, %v318
  %v337 = vpop.permute.xlu0 %336
  %v339 = vadd.f32 %v311, %v322
  %v340 = vadd.f32 %v312, %v327
  %v341 = vadd.f32 %v313, %v332
  %v342 = vadd.f32 %v314, %v337
  %vm343 = vcmp.ge.f32.partialorder %v339, 0.0
  %vm344 = vcmp.ge.f32.partialorder %v340, 0.0
  %vm345 = vcmp.ge.f32.partialorder %v341, 0.0
  %vm346 = vcmp.ge.f32.partialorder %v342, 0.0
  %v347 = vmul.f32 %v339, 0.2
  %v348 = vmul.f32 %v340, 0.2
  %v349 = vmul.f32 %v341, 0.2
  %v350 = vmul.f32 %v342, 0.2
  %v351 = vsel %vm343, %v339, %v347
  %v352 = vsel %vm344, %v340, %v348
  %v353 = vsel %vm345, %v341, %v349
  %v354 = vsel %vm346, %v342, %v350
  %v355 = vpack.c.bf16 %v351, %v351
  %v356 = vpack.c.bf16 %v352, %v352
  %v357 = vpack.c.bf16 %v353, %v353
  %v358 = vpack.c.bf16 %v354, %v354
  %359 = vst [vmem:[%s4] sm:$0xf] %v355
  %360 = vst [vmem:[%s4 + $0x4] sm:$0xf] %v356
  %361 = vst [vmem:[%s4 + $0x8] sm:$0xf] %v357
  %362 = vst [vmem:[%s4 + $0xc] sm:$0xf] %v358
  // Predicated region
  $region18: #{discriminator_forward.6} parent=0 // pred_check
    _
  $region19: #{discriminator_forward.6} parent=0 // pred_check_branch
    %364 = sbr.rel (0) target = $region21
  $region20: #{discriminator_forward.6} parent=0 // pred_region
    _
  $region21: #{discriminator_forward.6} parent=0 // pred_fallthru
    _
  // Predicated region
  $region22: #{discriminator_forward.6} parent=0 // pred_check
    _
  $region23: #{discriminator_forward.6} parent=0 // pred_check_branch
    %366 = sbr.rel (0) target = $region25
  $region24: #{discriminator_forward.6} parent=0 // pred_region
    _
  $region25: #{discriminator_forward.6} parent=0 // pred_fallthru
    _

// kernel: discriminator_forward.7
$region0: #{discriminator_forward.7}
  #allocation0 [shape = 'u32[]', space=smem, size = 0x4, offset = 0x4, fixed_abs, tag = 'smem constant byte address 0x4 - core index']
  #allocation1 [shape = 'u32[72,128]{1,0:T(1,128)}', space=vmem, size = 0x9000, scoped, tag = 'internal scratch']
  %s0 = inlined_call_operand.vmem [shape: bf16[64,512], index: 0, kind: input, shape index: {}]
  %s1 = inlined_call_operand.vmem [shape: bf16[512,32], index: 1, kind: input, shape index: {}]
  %s2 = inlined_call_operand.vmem [shape: f32[64,1], index: 2, kind: input, shape index: {}]
  %s3 = inlined_call_operand.vmem [shape: f32[64,1], index: 3, kind: input, shape index: {}]
  %s4 = inlined_call_operand.vmem [shape: f32[64,32], index: 4, kind: input, shape index: {}]
  %s5 = inlined_call_operand.vmem [shape: f32[2,32], index: 5, kind: input, shape index: {}]
  %s6 = inlined_call_operand.vmem [shape: f32[2,1], index: 6, kind: output, shape index: {}]
  %s7 = sld [smem:[#allocation0]]
  $region34: #{discriminator_forward.7} parent=0
    _
  %s9 = ssub.s32 1, %s7
  %s10 = scalar_select 0, %s9, %s7
  // Predicated region
  $region2: #{discriminator_forward.7} parent=0 // pred_check
    _
  $region3: #{discriminator_forward.7} parent=0 // pred_check_branch
    %12 = sbr.rel (0) target = $region5
  $region4: #{discriminator_forward.7} parent=0 // pred_region
    _
  $region5: #{discriminator_forward.7} parent=0 // pred_fallthru
    _
  // Predicated region
  $region6: #{discriminator_forward.7} parent=0 // pred_check
    _
  $region7: #{discriminator_forward.7} parent=0 // pred_check_branch
    %14 = sbr.rel (0) target = $region9
  $region8: #{discriminator_forward.7} parent=0 // pred_region
    _
  $region9: #{discriminator_forward.7} parent=0 // pred_fallthru
    _
  // Predicated region
  $region10: #{discriminator_forward.7} parent=0 // pred_check
    _
  $region11: #{discriminator_forward.7} parent=0 // pred_check_branch
    %16 = sbr.rel (0) target = $region13
  $region12: #{discriminator_forward.7} parent=0 // pred_region
    _
  $region13: #{discriminator_forward.7} parent=0 // pred_fallthru
    _
  // Predicated region
  $region14: #{discriminator_forward.7} parent=0 // pred_check
    _
  $region15: #{discriminator_forward.7} parent=0 // pred_check_branch
    %18 = sbr.rel (0) target = $region17
  $region16: #{discriminator_forward.7} parent=0 // pred_region
    _
  $region17: #{discriminator_forward.7} parent=0 // pred_fallthru
    _
  // Predicated region
  $region18: #{discriminator_forward.7} parent=0 // pred_check
    _
  $region19: #{discriminator_forward.7} parent=0 // pred_check_branch
    %20 = sbr.rel (0) target = $region21
  $region20: #{discriminator_forward.7} parent=0 // pred_region
    _
  $region21: #{discriminator_forward.7} parent=0 // pred_fallthru
    _
  // Predicated region
  $region22: #{discriminator_forward.7} parent=0 // pred_check
    _
  $region23: #{discriminator_forward.7} parent=0 // pred_check_branch
    %22 = sbr.rel (0) target = $region25
  $region24: #{discriminator_forward.7} parent=0 // pred_region
    _
  $region25: #{discriminator_forward.7} parent=0 // pred_fallthru
    _
  %v23 = vld [vmem:[%s0] sm:$0xff]
  %v24 = vld [vmem:[%s0 + $0x8] sm:$0xff]
  %v25 = vld [vmem:[%s0 + $0x10] sm:$0xff]
  %v26 = vld [vmem:[%s0 + $0x18] sm:$0xff]
  %v27 = vld [vmem:[%s0 + $0x20] sm:$0xff]
  %v28 = vld [vmem:[%s0 + $0x28] sm:$0xff]
  %v29 = vld [vmem:[%s0 + $0x30] sm:$0xff]
  %v30 = vld [vmem:[%s0 + $0x38] sm:$0xff]
  %v31 = vld [vmem:[%s0 + $0x40] sm:$0xff]
  %v32 = vld [vmem:[%s0 + $0x48] sm:$0xff]
  %v33 = vld [vmem:[%s0 + $0x50] sm:$0xff]
  %v34 = vld [vmem:[%s0 + $0x58] sm:$0xff]
  %v35 = vld [vmem:[%s0 + $0x60] sm:$0xff]
  %v36 = vld [vmem:[%s0 + $0x68] sm:$0xff]
  %v37 = vld [vmem:[%s0 + $0x70] sm:$0xff]
  %v38 = vld [vmem:[%s0 + $0x78] sm:$0xff]
  %v39 = vld [vmem:[%s1] sm:$0xf]
  %v40 = vld [vmem:[%s1 + $0x4] sm:$0xf]
  %v41 = vld [vmem:[%s1 + $0x8] sm:$0xf]
  %v42 = vld [vmem:[%s1 + $0xc] sm:$0xf]
  %v43 = vld [vmem:[%s1 + $0x10] sm:$0xf]
  %v44 = vld [vmem:[%s1 + $0x14] sm:$0xf]
  %v45 = vld [vmem:[%s1 + $0x18] sm:$0xf]
  %v46 = vld [vmem:[%s1 + $0x1c] sm:$0xf]
  %v47 = vld [vmem:[%s1 + $0x20] sm:$0xf]
  %v48 = vld [vmem:[%s1 + $0x24] sm:$0xf]
  %v49 = vld [vmem:[%s1 + $0x28] sm:$0xf]
  %v50 = vld [vmem:[%s1 + $0x2c] sm:$0xf]
  %v51 = vld [vmem:[%s1 + $0x30] sm:$0xf]
  %v52 = vld [vmem:[%s1 + $0x34] sm:$0xf]
  %v53 = vld [vmem:[%s1 + $0x38] sm:$0xf]
  %v54 = vld [vmem:[%s1 + $0x3c] sm:$0xf]
  %v55 = vld [vmem:[%s1 + $0x40] sm:$0xf]
  %v56 = vld [vmem:[%s1 + $0x44] sm:$0xf]
  %v57 = vld [vmem:[%s1 + $0x48] sm:$0xf]
  %v58 = vld [vmem:[%s1 + $0x4c] sm:$0xf]
  %v59 = vld [vmem:[%s1 + $0x50] sm:$0xf]
  %v60 = vld [vmem:[%s1 + $0x54] sm:$0xf]
  %v61 = vld [vmem:[%s1 + $0x58] sm:$0xf]
  %v62 = vld [vmem:[%s1 + $0x5c] sm:$0xf]
  %v63 = vld [vmem:[%s1 + $0x60] sm:$0xf]
  %v64 = vld [vmem:[%s1 + $0x64] sm:$0xf]
  %v65 = vld [vmem:[%s1 + $0x68] sm:$0xf]
  %v66 = vld [vmem:[%s1 + $0x6c] sm:$0xf]
  %v67 = vld [vmem:[%s1 + $0x70] sm:$0xf]
  %v68 = vld [vmem:[%s1 + $0x74] sm:$0xf]
  %v69 = vld [vmem:[%s1 + $0x78] sm:$0xf]
  %v70 = vld [vmem:[%s1 + $0x7c] sm:$0xf]
  %v71 = vld [vmem:[%s1 + $0x80] sm:$0xf]
  %v72 = vld [vmem:[%s1 + $0x84] sm:$0xf]
  %v73 = vld [vmem:[%s1 + $0x88] sm:$0xf]
  %v74 = vld [vmem:[%s1 + $0x8c] sm:$0xf]
  %v75 = vld [vmem:[%s1 + $0x90] sm:$0xf]
  %v76 = vld [vmem:[%s1 + $0x94] sm:$0xf]
  %v77 = vld [vmem:[%s1 + $0x98] sm:$0xf]
  %v78 = vld [vmem:[%s1 + $0x9c] sm:$0xf]
  %v79 = vld [vmem:[%s1 + $0xa0] sm:$0xf]
  %v80 = vld [vmem:[%s1 + $0xa4] sm:$0xf]
  %v81 = vld [vmem:[%s1 + $0xa8] sm:$0xf]
  %v82 = vld [vmem:[%s1 + $0xac] sm:$0xf]
  %v83 = vld [vmem:[%s1 + $0xb0] sm:$0xf]
  %v84 = vld [vmem:[%s1 + $0xb4] sm:$0xf]
  %v85 = vld [vmem:[%s1 + $0xb8] sm:$0xf]
  %v86 = vld [vmem:[%s1 + $0xbc] sm:$0xf]
  %v87 = vld [vmem:[%s1 + $0xc0] sm:$0xf]
  %v88 = vld [vmem:[%s1 + $0xc4] sm:$0xf]
  %v89 = vld [vmem:[%s1 + $0xc8] sm:$0xf]
  %v90 = vld [vmem:[%s1 + $0xcc] sm:$0xf]
  %v91 = vld [vmem:[%s1 + $0xd0] sm:$0xf]
  %v92 = vld [vmem:[%s1 + $0xd4] sm:$0xf]
  %v93 = vld [vmem:[%s1 + $0xd8] sm:$0xf]
  %v94 = vld [vmem:[%s1 + $0xdc] sm:$0xf]
  %v95 = vld [vmem:[%s1 + $0xe0] sm:$0xf]
  %v96 = vld [vmem:[%s1 + $0xe4] sm:$0xf]
  %v97 = vld [vmem:[%s1 + $0xe8] sm:$0xf]
  %v98 = vld [vmem:[%s1 + $0xec] sm:$0xf]
  %v99 = vld [vmem:[%s1 + $0xf0] sm:$0xf]
  %v100 = vld [vmem:[%s1 + $0xf4] sm:$0xf]
  %v101 = vld [vmem:[%s1 + $0xf8] sm:$0xf]
  %v102 = vld [vmem:[%s1 + $0xfc] sm:$0xf]
  %v119 = vunpack.c.l.b16 %v23
  %v120 = vunpack.c.h.b16 %v23
  %v121 = vunpack.c.l.b16 %v24
  %v122 = vunpack.c.h.b16 %v24
  %v123 = vunpack.c.l.b16 %v25
  %v124 = vunpack.c.h.b16 %v25
  %v125 = vunpack.c.l.b16 %v26
  %v126 = vunpack.c.h.b16 %v26
  %v127 = vunpack.c.l.b16 %v27
  %v128 = vunpack.c.h.b16 %v27
  %v129 = vunpack.c.l.b16 %v28
  %v130 = vunpack.c.h.b16 %v28
  %v131 = vunpack.c.l.b16 %v29
  %v132 = vunpack.c.h.b16 %v29
  %v133 = vunpack.c.l.b16 %v30
  %v134 = vunpack.c.h.b16 %v30
  %v135 = vunpack.c.l.b16 %v31
  %v136 = vunpack.c.h.b16 %v31
  %v137 = vunpack.c.l.b16 %v32
  %v138 = vunpack.c.h.b16 %v32
  %v139 = vunpack.c.l.b16 %v33
  %v140 = vunpack.c.h.b16 %v33
  %v141 = vunpack.c.l.b16 %v34
  %v142 = vunpack.c.h.b16 %v34
  %v143 = vunpack.c.l.b16 %v35
  %v144 = vunpack.c.h.b16 %v35
  %v145 = vunpack.c.l.b16 %v36
  %v146 = vunpack.c.h.b16 %v36
  %v147 = vunpack.c.l.b16 %v37
  %v148 = vunpack.c.h.b16 %v37
  %v149 = vunpack.c.l.b16 %v38
  %v150 = vunpack.c.h.b16 %v38
  %v151 = vpack.c.b16 %v123, %v119
  %v152 = vpack.c.b16 %v124, %v120
  %v153 = vpack.c.b16 %v125, %v121
  %v154 = vpack.c.b16 %v126, %v122
  %v155 = vpack.c.b16 %v131, %v127
  %v156 = vpack.c.b16 %v132, %v128
  %v157 = vpack.c.b16 %v133, %v129
  %v158 = vpack.c.b16 %v134, %v130
  %v159 = vpack.c.b16 %v139, %v135
  %v160 = vpack.c.b16 %v140, %v136
  %v161 = vpack.c.b16 %v141, %v137
  %v162 = vpack.c.b16 %v142, %v138
  %v163 = vpack.c.b16 %v147, %v143
  %v164 = vpack.c.b16 %v148, %v144
  %v165 = vpack.c.b16 %v149, %v145
  %v166 = vpack.c.b16 %v150, %v146
  %v247 = vunpack.c.l.b16 %v39
  %v248 = vunpack.c.l.b16 %v40
  %v249 = vunpack.c.l.b16 %v41
  %v250 = vunpack.c.l.b16 %v42
  %v251 = vunpack.c.l.b16 %v43
  %v252 = vunpack.c.l.b16 %v44
  %v253 = vunpack.c.l.b16 %v45
  %v254 = vunpack.c.l.b16 %v46
  %v255 = vunpack.c.l.b16 %v47
  %v256 = vunpack.c.l.b16 %v48
  %v257 = vunpack.c.l.b16 %v49
  %v258 = vunpack.c.l.b16 %v50
  %v259 = vunpack.c.l.b16 %v51
  %v260 = vunpack.c.l.b16 %v52
  %v261 = vunpack.c.l.b16 %v53
  %v262 = vunpack.c.l.b16 %v54
  %v263 = vunpack.c.l.b16 %v55
  %v264 = vunpack.c.l.b16 %v56
  %v265 = vunpack.c.l.b16 %v57
  %v266 = vunpack.c.l.b16 %v58
  %v267 = vunpack.c.l.b16 %v59
  %v268 = vunpack.c.l.b16 %v60
  %v269 = vunpack.c.l.b16 %v61
  %v270 = vunpack.c.l.b16 %v62
  %v271 = vunpack.c.l.b16 %v63
  %v272 = vunpack.c.l.b16 %v64
  %v273 = vunpack.c.l.b16 %v65
  %v274 = vunpack.c.l.b16 %v66
  %v275 = vunpack.c.l.b16 %v67
  %v276 = vunpack.c.l.b16 %v68
  %v277 = vunpack.c.l.b16 %v69
  %v278 = vunpack.c.l.b16 %v70
  %v279 = vunpack.c.l.b16 %v71
  %v280 = vunpack.c.l.b16 %v72
  %v281 = vunpack.c.l.b16 %v73
  %v282 = vunpack.c.l.b16 %v74
  %v283 = vunpack.c.l.b16 %v75
  %v284 = vunpack.c.l.b16 %v76
  %v285 = vunpack.c.l.b16 %v77
  %v286 = vunpack.c.l.b16 %v78
  %v287 = vunpack.c.l.b16 %v79
  %v288 = vunpack.c.l.b16 %v80
  %v289 = vunpack.c.l.b16 %v81
  %v290 = vunpack.c.l.b16 %v82
  %v291 = vunpack.c.l.b16 %v83
  %v292 = vunpack.c.l.b16 %v84
  %v293 = vunpack.c.l.b16 %v85
  %v294 = vunpack.c.l.b16 %v86
  %v295 = vunpack.c.l.b16 %v87
  %v296 = vunpack.c.l.b16 %v88
  %v297 = vunpack.c.l.b16 %v89
  %v298 = vunpack.c.l.b16 %v90
  %v299 = vunpack.c.l.b16 %v91
  %v300 = vunpack.c.l.b16 %v92
  %v301 = vunpack.c.l.b16 %v93
  %v302 = vunpack.c.l.b16 %v94
  %v303 = vunpack.c.l.b16 %v95
  %v304 = vunpack.c.l.b16 %v96
  %v305 = vunpack.c.l.b16 %v97
  %v306 = vunpack.c.l.b16 %v98
  %v307 = vunpack.c.l.b16 %v99
  %v308 = vunpack.c.l.b16 %v100
  %v309 = vunpack.c.l.b16 %v101
  %v310 = vunpack.c.l.b16 %v102
  %v311 = vpack.c.b16 %v248, %v247
  %v312 = vpack.c.b16 %v250, %v249
  %v313 = vpack.c.b16 %v252, %v251
  %v314 = vpack.c.b16 %v254, %v253
  %v315 = vpack.c.b16 %v256, %v255
  %v316 = vpack.c.b16 %v258, %v257
  %v317 = vpack.c.b16 %v260, %v259
  %v318 = vpack.c.b16 %v262, %v261
  %v319 = vpack.c.b16 %v264, %v263
  %v320 = vpack.c.b16 %v266, %v265
  %v321 = vpack.c.b16 %v268, %v267
  %v322 = vpack.c.b16 %v270, %v269
  %v323 = vpack.c.b16 %v272, %v271
  %v324 = vpack.c.b16 %v274, %v273
  %v325 = vpack.c.b16 %v276, %v275
  %v326 = vpack.c.b16 %v278, %v277
  %v327 = vpack.c.b16 %v280, %v279
  %v328 = vpack.c.b16 %v282, %v281
  %v329 = vpack.c.b16 %v284, %v283
  %v330 = vpack.c.b16 %v286, %v285
  %v331 = vpack.c.b16 %v288, %v287
  %v332 = vpack.c.b16 %v290, %v289
  %v333 = vpack.c.b16 %v292, %v291
  %v334 = vpack.c.b16 %v294, %v293
  %v335 = vpack.c.b16 %v296, %v295
  %v336 = vpack.c.b16 %v298, %v297
  %v337 = vpack.c.b16 %v300, %v299
  %v338 = vpack.c.b16 %v302, %v301
  %v339 = vpack.c.b16 %v304, %v303
  %v340 = vpack.c.b16 %v306, %v305
  %v341 = vpack.c.b16 %v308, %v307
  %v342 = vpack.c.b16 %v310, %v309
  %375 = vmatpush.bf16.msra.mxu0 %v318
  %376 = vmatpush.bf16.msra.mxu0 %v317
  %377 = vmatpush.bf16.msra.mxu0 %v316
  %378 = vmatpush.bf16.msra.mxu0 %v315
  %379 = vmatpush.bf16.msra.mxu0 %v314
  %380 = vmatpush.bf16.msra.mxu0 %v313
  %381 = vmatpush.bf16.msra.mxu0 %v312
  %382 = vmatpush.bf16.msra.mxu0 %v311
  %383 = vmatmul.bf16.gmra.mxu0 %v151
  %v384 = vpop.f32.mrf.mxu0
  %v385 = vadd.f32 0.0, %v384
  %v386 = vpop.f32.mrf.mxu0
  %v387 = vadd.f32 0.0, %v386
  %388 = vmatmul.bf16.gmra.mxu0 %v155
  %v389 = vpop.f32.mrf.mxu0
  %v390 = vadd.f32 0.0, %v389
  %v391 = vpop.f32.mrf.mxu0
  %v392 = vadd.f32 0.0, %v391
  %393 = vmatmul.bf16.gmra.mxu0 %v159
  %v394 = vpop.f32.mrf.mxu0
  %v395 = vadd.f32 0.0, %v394
  %v396 = vpop.f32.mrf.mxu0
  %v397 = vadd.f32 0.0, %v396
  %398 = vmatmul.bf16.gmra.mxu0 %v163
  %v399 = vpop.f32.mrf.mxu0
  %v400 = vadd.f32 0.0, %v399
  %v401 = vpop.f32.mrf.mxu0
  %v402 = vadd.f32 0.0, %v401
  %403 = vdwg.mxu0
  %404 = vmatpush.bf16.msra.mxu0 %v326
  %405 = vmatpush.bf16.msra.mxu0 %v325
  %406 = vmatpush.bf16.msra.mxu0 %v324
  %407 = vmatpush.bf16.msra.mxu0 %v323
  %408 = vmatpush.bf16.msra.mxu0 %v322
  %409 = vmatpush.bf16.msra.mxu0 %v321
  %410 = vmatpush.bf16.msra.mxu0 %v320
  %411 = vmatpush.bf16.msra.mxu0 %v319
  %412 = vmatmul.bf16.gmra.mxu0 %v152
  %v413 = vpop.f32.mrf.mxu0
  %v414 = vadd.f32 %v385, %v413
  %v415 = vpop.f32.mrf.mxu0
  %v416 = vadd.f32 %v387, %v415
  %417 = vmatmul.bf16.gmra.mxu0 %v156
  %v418 = vpop.f32.mrf.mxu0
  %v419 = vadd.f32 %v390, %v418
  %v420 = vpop.f32.mrf.mxu0
  %v421 = vadd.f32 %v392, %v420
  %422 = vmatmul.bf16.gmra.mxu0 %v160
  %v423 = vpop.f32.mrf.mxu0
  %v424 = vadd.f32 %v395, %v423
  %v425 = vpop.f32.mrf.mxu0
  %v426 = vadd.f32 %v397, %v425
  %427 = vmatmul.bf16.gmra.mxu0 %v164
  %v428 = vpop.f32.mrf.mxu0
  %v429 = vadd.f32 %v400, %v428
  %v430 = vpop.f32.mrf.mxu0
  %v431 = vadd.f32 %v402, %v430
  %432 = vdwg.mxu0
  %433 = vmatpush.bf16.msra.mxu0 %v334
  %434 = vmatpush.bf16.msra.mxu0 %v333
  %435 = vmatpush.bf16.msra.mxu0 %v332
  %436 = vmatpush.bf16.msra.mxu0 %v331
  %437 = vmatpush.bf16.msra.mxu0 %v330
  %438 = vmatpush.bf16.msra.mxu0 %v329
  %439 = vmatpush.bf16.msra.mxu0 %v328
  %440 = vmatpush.bf16.msra.mxu0 %v327
  %441 = vmatmul.bf16.gmra.mxu0 %v153
  %v442 = vpop.f32.mrf.mxu0
  %v443 = vadd.f32 %v414, %v442
  %v444 = vpop.f32.mrf.mxu0
  %v445 = vadd.f32 %v416, %v444
  %446 = vmatmul.bf16.gmra.mxu0 %v157
  %v447 = vpop.f32.mrf.mxu0
  %v448 = vadd.f32 %v419, %v447
  %v449 = vpop.f32.mrf.mxu0
  %v450 = vadd.f32 %v421, %v449
  %451 = vmatmul.bf16.gmra.mxu0 %v161
  %v452 = vpop.f32.mrf.mxu0
  %v453 = vadd.f32 %v424, %v452
  %v454 = vpop.f32.mrf.mxu0
  %v455 = vadd.f32 %v426, %v454
  %456 = vmatmul.bf16.gmra.mxu0 %v165
  %v457 = vpop.f32.mrf.mxu0
  %v458 = vadd.f32 %v429, %v457
  %v459 = vpop.f32.mrf.mxu0
  %v460 = vadd.f32 %v431, %v459
  %461 = vdwg.mxu0
  %462 = vmatpush.bf16.msra.mxu0 %v342
  %463 = vmatpush.bf16.msra.mxu0 %v341
  %464 = vmatpush.bf16.msra.mxu0 %v340
  %465 = vmatpush.bf16.msra.mxu0 %v339
  %466 = vmatpush.bf16.msra.mxu0 %v338
  %467 = vmatpush.bf16.msra.mxu0 %v337
  %468 = vmatpush.bf16.msra.mxu0 %v336
  %469 = vmatpush.bf16.msra.mxu0 %v335
  %470 = vmatmul.bf16.gmra.mxu0 %v154
  %v471 = vpop.f32.mrf.mxu0
  %v472 = vadd.f32 %v443, %v471
  %v473 = vpop.f32.mrf.mxu0
  %v474 = vadd.f32 %v445, %v473
  %475 = vmatmul.bf16.gmra.mxu0 %v158
  %v476 = vpop.f32.mrf.mxu0
  %v477 = vadd.f32 %v448, %v476
  %v478 = vpop.f32.mrf.mxu0
  %v479 = vadd.f32 %v450, %v478
  %480 = vmatmul.bf16.gmra.mxu0 %v162
  %v481 = vpop.f32.mrf.mxu0
  %v482 = vadd.f32 %v453, %v481
  %v483 = vpop.f32.mrf.mxu0
  %v484 = vadd.f32 %v455, %v483
  %485 = vmatmul.bf16.gmra.mxu0 %v166
  %v486 = vpop.f32.mrf.mxu0
  %v487 = vadd.f32 %v458, %v486
  %v488 = vpop.f32.mrf.mxu0
  %v489 = vadd.f32 %v460, %v488
  %490 = vdwg.mxu0
  %vm491 = vcmask 261120
  %v492 = vsel %vm491, %v472, 0.0
  %493 = vadd.xlane.f32.xlu0 %v492
  %v494 = vpop.xlane.xlu0 %493
  %v495 = vsel %vm491, %v474, 0.0
  %496 = vadd.xlane.f32.xlu0 %v495
  %v497 = vpop.xlane.xlu0 %496
  %v498 = vsel %vm491, %v477, 0.0
  %499 = vadd.xlane.f32.xlu0 %v498
  %v500 = vpop.xlane.xlu0 %499
  %v501 = vsel %vm491, %v479, 0.0
  %502 = vadd.xlane.f32.xlu0 %v501
  %v503 = vpop.xlane.xlu0 %502
  %v504 = vsel %vm491, %v482, 0.0
  %505 = vadd.xlane.f32.xlu0 %v504
  %v506 = vpop.xlane.xlu0 %505
  %v507 = vsel %vm491, %v484, 0.0
  %508 = vadd.xlane.f32.xlu0 %v507
  %v509 = vpop.xlane.xlu0 %508
  %v510 = vsel %vm491, %v487, 0.0
  %511 = vadd.xlane.f32.xlu0 %v510
  %v512 = vpop.xlane.xlu0 %511
  %v513 = vsel %vm491, %v489, 0.0
  %514 = vadd.xlane.f32.xlu0 %v513
  %v515 = vpop.xlane.xlu0 %514
  %v516 = vmul.f32 %v494, 0.03125
  %v517 = vmul.f32 %v497, 0.03125
  %v518 = vmul.f32 %v500, 0.03125
  %v519 = vmul.f32 %v503, 0.03125
  %v520 = vmul.f32 %v506, 0.03125
  %v521 = vmul.f32 %v509, 0.03125
  %v522 = vmul.f32 %v512, 0.03125
  %v523 = vmul.f32 %v515, 0.03125
  %v524 = vsub.f32 %v472, %v516
  %v525 = vsub.f32 %v474, %v517
  %v526 = vsub.f32 %v477, %v518
  %v527 = vsub.f32 %v479, %v519
  %v528 = vsub.f32 %v482, %v520
  %v529 = vsub.f32 %v484, %v521
  %v530 = vsub.f32 %v487, %v522
  %v531 = vsub.f32 %v489, %v523
  %v532 = vmul.f32 %v524, %v524
  %v533 = vmul.f32 %v525, %v525
  %v534 = vmul.f32 %v526, %v526
  %v535 = vmul.f32 %v527, %v527
  %v536 = vmul.f32 %v528, %v528
  %v537 = vmul.f32 %v529, %v529
  %v538 = vmul.f32 %v530, %v530
  %v539 = vmul.f32 %v531, %v531
  %v540 = vsel %vm491, %v532, 0.0
  %541 = vadd.xlane.f32.xlu0 %v540
  %v542 = vpop.xlane.xlu0 %541
  %v543 = vsel %vm491, %v533, 0.0
  %544 = vadd.xlane.f32.xlu0 %v543
  %v545 = vpop.xlane.xlu0 %544
  %v546 = vsel %vm491, %v534, 0.0
  %547 = vadd.xlane.f32.xlu0 %v546
  %v548 = vpop.xlane.xlu0 %547
  %v549 = vsel %vm491, %v535, 0.0
  %550 = vadd.xlane.f32.xlu0 %v549
  %v551 = vpop.xlane.xlu0 %550
  %v552 = vsel %vm491, %v536, 0.0
  %553 = vadd.xlane.f32.xlu0 %v552
  %v554 = vpop.xlane.xlu0 %553
  %v555 = vsel %vm491, %v537, 0.0
  %556 = vadd.xlane.f32.xlu0 %v555
  %v557 = vpop.xlane.xlu0 %556
  %v558 = vsel %vm491, %v538, 0.0
  %559 = vadd.xlane.f32.xlu0 %v558
  %v560 = vpop.xlane.xlu0 %559
  %v561 = vsel %vm491, %v539, 0.0
  %562 = vadd.xlane.f32.xlu0 %v561
  %v563 = vpop.xlane.xlu0 %562
  %v564 = vmul.f32 %v542, 0.03125
  %v565 = vmul.f32 %v545, 0.03125
  %v566 = vmul.f32 %v548, 0.03125
  %v567 = vmul.f32 %v551, 0.03125
  %v568 = vmul.f32 %v554, 0.03125
  %v569 = vmul.f32 %v557, 0.03125
  %v570 = vmul.f32 %v560, 0.03125
  %v571 = vmul.f32 %v563, 0.03125
  %v572 = vld [vmem:[%s2] sm:$0xff]
  %v573 = vld [vmem:[%s2 + $0x8] sm:$0xff]
  %v574 = vld [vmem:[%s2 + $0x10] sm:$0xff]
  %v575 = vld [vmem:[%s2 + $0x18] sm:$0xff]
  %v576 = vld [vmem:[%s2 + $0x20] sm:$0xff]
  %v577 = vld [vmem:[%s2 + $0x28] sm:$0xff]
  %v578 = vld [vmem:[%s2 + $0x30] sm:$0xff]
  %v579 = vld [vmem:[%s2 + $0x38] sm:$0xff]
  %v580 = vadd.f32 %v564, 1e-05
  %v581 = vadd.f32 %v565, 1e-05
  %v582 = vadd.f32 %v566, 1e-05
  %v583 = vadd.f32 %v567, 1e-05
  %v584 = vadd.f32 %v568, 1e-05
  %v585 = vadd.f32 %v569, 1e-05
  %v586 = vadd.f32 %v570, 1e-05
  %v587 = vadd.f32 %v571, 1e-05
  %v588 = vrsqrt.pop %v580
  %v589 = vmul.f32 %v588, %v580
  %v590 = vmul.f32 %v589, %v588
  %v591 = vmul.f32 0.5, %v590
  %v592 = vsub.f32 1.5, %v591
  %v593 = vmul.f32 %v588, %v592
  %vm594 = vweird.f32 %v580
  %vm595 = vweird.f32 %v588
  %vm596 = vmor %vm594, %vm595
  %v597 = vsel %vm596, %v588, %v593
  %v598 = vrsqrt.pop %v581
  %v599 = vmul.f32 %v598, %v581
  %v600 = vmul.f32 %v599, %v598
  %v601 = vmul.f32 0.5, %v600
  %v602 = vsub.f32 1.5, %v601
  %v603 = vmul.f32 %v598, %v602
  %vm604 = vweird.f32 %v581
  %vm605 = vweird.f32 %v598
  %vm606 = vmor %vm604, %vm605
  %v607 = vsel %vm606, %v598, %v603
  %v608 = vrsqrt.pop %v582
  %v609 = vmul.f32 %v608, %v582
  %v610 = vmul.f32 %v609, %v608
  %v611 = vmul.f32 0.5, %v610
  %v612 = vsub.f32 1.5, %v611
  %v613 = vmul.f32 %v608, %v612
  %vm614 = vweird.f32 %v582
  %vm615 = vweird.f32 %v608
  %vm616 = vmor %vm614, %vm615
  %v617 = vsel %vm616, %v608, %v613
  %v618 = vrsqrt.pop %v583
  %v619 = vmul.f32 %v618, %v583
  %v620 = vmul.f32 %v619, %v618
  %v621 = vmul.f32 0.5, %v620
  %v622 = vsub.f32 1.5, %v621
  %v623 = vmul.f32 %v618, %v622
  %vm624 = vweird.f32 %v583
  %vm625 = vweird.f32 %v618
  %vm626 = vmor %vm624, %vm625
  %v627 = vsel %vm626, %v618, %v623
  %v628 = vrsqrt.pop %v584
  %v629 = vmul.f32 %v628, %v584
  %v630 = vmul.f32 %v629, %v628
  %v631 = vmul.f32 0.5, %v630
  %v632 = vsub.f32 1.5, %v631
  %v633 = vmul.f32 %v628, %v632
  %vm634 = vweird.f32 %v584
  %vm635 = vweird.f32 %v628
  %vm636 = vmor %vm634, %vm635
  %v637 = vsel %vm636, %v628, %v633
  %v638 = vrsqrt.pop %v585
  %v639 = vmul.f32 %v638, %v585
  %v640 = vmul.f32 %v639, %v638
  %v641 = vmul.f32 0.5, %v640
  %v642 = vsub.f32 1.5, %v641
  %v643 = vmul.f32 %v638, %v642
  %vm644 = vweird.f32 %v585
  %vm645 = vweird.f32 %v638
  %vm646 = vmor %vm644, %vm645
  %v647 = vsel %vm646, %v638, %v643
  %v648 = vrsqrt.pop %v586
  %v649 = vmul.f32 %v648, %v586
  %v650 = vmul.f32 %v649, %v648
  %v651 = vmul.f32 0.5, %v650
  %v652 = vsub.f32 1.5, %v651
  %v653 = vmul.f32 %v648, %v652
  %vm654 = vweird.f32 %v586
  %vm655 = vweird.f32 %v648
  %vm656 = vmor %vm654, %vm655
  %v657 = vsel %vm656, %v648, %v653
  %v658 = vrsqrt.pop %v587
  %v659 = vmul.f32 %v658, %v587
  %v660 = vmul.f32 %v659, %v658
  %v661 = vmul.f32 0.5, %v660
  %v662 = vsub.f32 1.5, %v661
  %v663 = vmul.f32 %v658, %v662
  %vm664 = vweird.f32 %v587
  %vm665 = vweird.f32 %v658
  %vm666 = vmor %vm664, %vm665
  %v667 = vsel %vm666, %v658, %v663
  %v668 = vmul.f32 %v572, %v597
  %v669 = vmul.f32 %v573, %v607
  %v670 = vmul.f32 %v574, %v617
  %v671 = vmul.f32 %v575, %v627
  %v672 = vmul.f32 %v576, %v637
  %v673 = vmul.f32 %v577, %v647
  %v674 = vmul.f32 %v578, %v657
  %v675 = vmul.f32 %v579, %v667
  %677 = vset.pattern.permute.xlu0 0
  %678 = vperm.xlu0 %677, %v668
  %v679 = vpop.permute.xlu0 %678
  %682 = vset.pattern.permute.xlu0 0
  %683 = vperm.xlu0 %682, %v669
  %v684 = vpop.permute.xlu0 %683
  %687 = vset.pattern.permute.xlu0 0
  %688 = vperm.xlu0 %687, %v670
  %v689 = vpop.permute.xlu0 %688
  %692 = vset.pattern.permute.xlu0 0
  %693 = vperm.xlu0 %692, %v671
  %v694 = vpop.permute.xlu0 %693
  %697 = vset.pattern.permute.xlu0 0
  %698 = vperm.xlu0 %697, %v672
  %v699 = vpop.permute.xlu0 %698
  %702 = vset.pattern.permute.xlu0 0
  %703 = vperm.xlu0 %702, %v673
  %v704 = vpop.permute.xlu0 %703
  %707 = vset.pattern.permute.xlu0 0
  %708 = vperm.xlu0 %707, %v674
  %v709 = vpop.permute.xlu0 %708
  %712 = vset.pattern.permute.xlu0 0
  %713 = vperm.xlu0 %712, %v675
  %v714 = vpop.permute.xlu0 %713
  %v716 = vmul.f32 %v524, %v679
  %v717 = vmul.f32 %v525, %v684
  %v718 = vmul.f32 %v526, %v689
  %v719 = vmul.f32 %v527, %v694
  %v720 = vmul.f32 %v528, %v699
  %v721 = vmul.f32 %v529, %v704
  %v722 = vmul.f32 %v530, %v709
  %v723 = vmul.f32 %v531, %v714
  %v724 = vld [vmem:[%s3] sm:$0xff]
  %v725 = vld [vmem:[%s3 + $0x8] sm:$0xff]
  %v726 = vld [vmem:[%s3 + $0x10] sm:$0xff]
  %v727 = vld [vmem:[%s3 + $0x18] sm:$0xff]
  %v728 = vld [vmem:[%s3 + $0x20] sm:$0xff]
  %v729 = vld [vmem:[%s3 + $0x28] sm:$0xff]
  %v730 = vld [vmem:[%s3 + $0x30] sm:$0xff]
  %v731 = vld [vmem:[%s3 + $0x38] sm:$0xff]
  %733 = vset.pattern.permute.xlu0 0
  %734 = vperm.xlu0 %733, %v724
  %v735 = vpop.permute.xlu0 %734
  %738 = vset.pattern.permute.xlu0 0
  %739 = vperm.xlu0 %738, %v725
  %v740 = vpop.permute.xlu0 %739
  %743 = vset.pattern.permute.xlu0 0
  %744 = vperm.xlu0 %743, %v726
  %v745 = vpop.permute.xlu0 %744
  %748 = vset.pattern.permute.xlu0 0
  %749 = vperm.xlu0 %748, %v727
  %v750 = vpop.permute.xlu0 %749
  %753 = vset.pattern.permute.xlu0 0
  %754 = vperm.xlu0 %753, %v728
  %v755 = vpop.permute.xlu0 %754
  %758 = vset.pattern.permute.xlu0 0
  %759 = vperm.xlu0 %758, %v729
  %v760 = vpop.permute.xlu0 %759
  %763 = vset.pattern.permute.xlu0 0
  %764 = vperm.xlu0 %763, %v730
  %v765 = vpop.permute.xlu0 %764
  %768 = vset.pattern.permute.xlu0 0
  %769 = vperm.xlu0 %768, %v731
  %v770 = vpop.permute.xlu0 %769
  %v772 = vadd.f32 %v716, %v735
  %v773 = vadd.f32 %v717, %v740
  %v774 = vadd.f32 %v718, %v745
  %v775 = vadd.f32 %v719, %v750
  %v776 = vadd.f32 %v720, %v755
  %v777 = vadd.f32 %v721, %v760
  %v778 = vadd.f32 %v722, %v765
  %v779 = vadd.f32 %v723, %v770
  %vm780 = vcmp.ge.f32.partialorder %v772, 0.0
  %vm781 = vcmp.ge.f32.partialorder %v773, 0.0
  %vm782 = vcmp.ge.f32.partialorder %v774, 0.0
  %vm783 = vcmp.ge.f32.partialorder %v775, 0.0
  %vm784 = vcmp.ge.f32.partialorder %v776, 0.0
  %vm785 = vcmp.ge.f32.partialorder %v777, 0.0
  %vm786 = vcmp.ge.f32.partialorder %v778, 0.0
  %vm787 = vcmp.ge.f32.partialorder %v779, 0.0
  %v788 = vmul.f32 %v772, 0.2
  %v789 = vmul.f32 %v773, 0.2
  %v790 = vmul.f32 %v774, 0.2
  %v791 = vmul.f32 %v775, 0.2
  %v792 = vmul.f32 %v776, 0.2
  %v793 = vmul.f32 %v777, 0.2
  %v794 = vmul.f32 %v778, 0.2
  %v795 = vmul.f32 %v779, 0.2
  %v796 = vsel %vm780, %v772, %v788
  %v797 = vsel %vm781, %v773, %v789
  %v798 = vsel %vm782, %v774, %v790
  %v799 = vsel %vm783, %v775, %v791
  %v800 = vsel %vm784, %v776, %v792
  %v801 = vsel %vm785, %v777, %v793
  %v802 = vsel %vm786, %v778, %v794
  %v803 = vsel %vm787, %v779, %v795
  %v804 = vld [vmem:[%s4] sm:$0xff]
  %v805 = vld [vmem:[%s4 + $0x8] sm:$0xff]
  %v806 = vld [vmem:[%s4 + $0x10] sm:$0xff]
  %v807 = vld [vmem:[%s4 + $0x18] sm:$0xff]
  %v808 = vld [vmem:[%s4 + $0x20] sm:$0xff]
  %v809 = vld [vmem:[%s4 + $0x28] sm:$0xff]
  %v810 = vld [vmem:[%s4 + $0x30] sm:$0xff]
  %v811 = vld [vmem:[%s4 + $0x38] sm:$0xff]
  %v812 = vmul.f32 %v796, %v804
  %v813 = vmul.f32 %v797, %v805
  %v814 = vmul.f32 %v798, %v806
  %v815 = vmul.f32 %v799, %v807
  %v816 = vmul.f32 %v800, %v808
  %v817 = vmul.f32 %v801, %v809
  %v818 = vmul.f32 %v802, %v810
  %v819 = vmul.f32 %v803, %v811
  %v820 = vsel %vm491, %v812, 0.0
  %v821 = vsel %vm491, %v813, 0.0
  %v822 = vadd.f32 %v820, %v821
  %v823 = vsel %vm491, %v814, 0.0
  %v824 = vadd.f32 %v822, %v823
  %v825 = vsel %vm491, %v815, 0.0
  %v826 = vadd.f32 %v824, %v825
  %v827 = vsel %vm491, %v816, 0.0
  %v828 = vadd.f32 %v826, %v827
  %v829 = vsel %vm491, %v817, 0.0
  %v830 = vadd.f32 %v828, %v829
  %v831 = vsel %vm491, %v818, 0.0
  %v832 = vadd.f32 %v830, %v831
  %v833 = vsel %vm491, %v819, 0.0
  %v834 = vadd.f32 %v832, %v833
  %v835 = vrot.slane %v834, 4
  %v836 = vadd.f32 %v834, %v835
  %v837 = vrot.slane %v836, 2
  %v838 = vadd.f32 %v836, %v837
  %v839 = vrot.slane %v838, 1
  %v840 = vadd.f32 %v838, %v839
  %v841 = vld [vmem:[%s5] sm:$0x3]
  %v842 = vmul.f32 %v840, %v841
  %vm843 = vcmask 254976
  %v844 = vsel %vm843, %v842, 0.0
  %845 = vadd.xlane.f32.xlu0 %v844
  %v846 = vpop.xlane.xlu0 %845
  %v847 = vxor.u32 %v846, 2147483648
  %v848 = vmul.f32 %v847, 1.442695
  %v849 = vpow.pop %v848
  %v850 = vadd.f32 %v849, 1.0
  %v851 = vrcp.pop %v850
  %v852 = vmul.f32 %v850, %v851
  %v853 = vsub.f32 1.0, %v852
  %v854 = vmul.f32 %v851, %v853
  %v855 = vadd.f32 %v851, %v854
  %vm856 = vweird.f32 %v850
  %vm857 = vweird.f32 %v851
  %vm858 = vmor %vm856, %vm857
  %v859 = vsel %vm858, %v851, %v855
  %v860 = vand.u32 2147483647, %v850
  %vm861 = vcmp.eq.f32.partialorder %v860, 8.507059e+37
  %v862 = vand.u32 %v850, 2147483648
  %v863 = vor.u32 1.1754944e-38, %v862
  %v864 = vsel %vm861, %v863, %v859
  %v865 = vmul.f32 1.0, %v864
  %vm866 = vcmask 1024
  %867 = vst.msk [vmem:[%s6] sm:$0x3] %vm866, %v865
  // Predicated region
  $region26: #{discriminator_forward.7} parent=0 // pred_check
    _
  $region27: #{discriminator_forward.7} parent=0 // pred_check_branch
    %869 = sbr.rel (0) target = $region29
  $region28: #{discriminator_forward.7} parent=0 // pred_region
    _
  $region29: #{discriminator_forward.7} parent=0 // pred_fallthru
    _
  // Predicated region
  $region30: #{discriminator_forward.7} parent=0 // pred_check
    _
  $region31: #{discriminator_forward.7} parent=0 // pred_check_branch
    %871 = sbr.rel (0) target = $region33
  $region32: #{discriminator_forward.7} parent=0 // pred_region
    _
  $region33: #{discriminator_forward.7} parent=0 // pred_fallthru
    _

</llo_original>
